<compile_context>
chip_gen: v6e
topology: v6e:2x2x1
jax: 0.10.0
libtpu: 0.0.40
codegen_flags: <defaults>
</compile_context>

<pallas_src>
import jax
import jax.numpy as jnp
from jax.experimental import pallas as pl
from jax.experimental.pallas import tpu as pltpu


# ---------------------------------------------------------------------------
# host-side weight preparation: fold conv taps into banded MXU matrices
# ---------------------------------------------------------------------------
def _banded_conv1d_weights(w3, L):
    """(3, Cin, Cout) conv1d taps -> (L*C, L*C) banded matrix acting on the
    length-channel fused (lane) axis.  Zero padding is implicit (band edge)."""
    C = w3.shape[-1]
    LC = L * C
    lane = jnp.arange(LC)
    pos, ch = lane // C, lane % C
    k = pos[:, None] - pos[None, :] + 1          # input pos - output pos + 1
    valid = (k >= 0) & (k <= 2)
    big = w3[jnp.clip(k, 0, 2), ch[:, None], ch[None, :]]
    return (big * valid.astype(w3.dtype)).astype(jnp.float32)


def _banded_conv2d_weights(w9, W):
    """(9, Cin, Cout) 3x3 conv taps (index ky*3+kx) -> (3, W*C, W*C): one
    banded matrix per ky tap; kx shifts + channel mixing live in the band."""
    C = w9.shape[-1]
    WC = W * C
    wk = w9.reshape(3, 3, C, C)                  # (ky, kx, ci, co)
    lane = jnp.arange(WC)
    pos, ch = lane // C, lane % C
    kx = pos[:, None] - pos[None, :] + 1
    valid = (kx >= 0) & (kx <= 2)
    big = wk[:, jnp.clip(kx, 0, 2), ch[:, None], ch[None, :]]
    return (big * valid[None].astype(w9.dtype)).astype(jnp.float32)


_PARAM_ORDER = ("bn_tfa_s", "bn_tfa_b",
                "tbw1", "tb1", "tbw2", "tb2",
                "fw1", "fb1", "fw2", "fb2",
                "favg", "frep",
                "bw1", "bn1_s", "bn1_b",
                "bw2", "bn2_s", "bn2_b")


def prepare_kernel_params(p, W):
    """Convert torch-style params (see init_params) into kernel-ready arrays."""
    C = p["tw1"].shape[-1]
    # residual add / BN broadcast require inplanes == planes (stride=1, no downsample)
    assert p["c1w"].shape[1] == p["c1w"].shape[2] == C
    assert p["c2w"].shape[1] == p["c2w"].shape[2] == C
    WC = W * C

    def tile_w(v):                               # per-channel (1,C) -> lane-tiled (1, W*C)
        return jnp.tile(v.reshape(-1), W).reshape(1, WC).astype(jnp.float32)

    eye = jnp.eye(C, dtype=jnp.float32)
    return {
        "bn_tfa_s": tile_w(p["bn_tfa_s"]), "bn_tfa_b": tile_w(p["bn_tfa_b"]),
        "tbw1": _banded_conv1d_weights(p["tw1"], W), "tb1": tile_w(p["tb1"]),
        "tbw2": _banded_conv1d_weights(p["tw2"], W), "tb2": tile_w(p["tb2"]),
        "fw1": p["fw1"].astype(jnp.float32), "fb1": p["fb1"].reshape(1, C).astype(jnp.float32),
        "fw2": p["fw2"].astype(jnp.float32), "fb2": p["fb2"].reshape(1, C).astype(jnp.float32),
        "favg": jnp.tile(eye, (W, 1)) / W,        # (W*C, C): mean over W via MXU
        "frep": jnp.tile(eye, (1, W)),            # (C, W*C): replicate channels over W lanes
        "bw1": _banded_conv2d_weights(p["c1w"], W),
        "bn1_s": tile_w(p["bn1_s"]), "bn1_b": tile_w(p["bn1_b"]),
        "bw2": _banded_conv2d_weights(p["c2w"], W),
        "bn2_s": tile_w(p["bn2_s"]), "bn2_b": tile_w(p["bn2_b"]),
    }


# ---------------------------------------------------------------------------
# fused kernel: Nb images per grid step, activations as (Nb, H, W*C)
# ---------------------------------------------------------------------------
def _block_kernel(x_ref,
                  bn_tfa_s, bn_tfa_b,
                  tbw1, tb1, tbw2, tb2,
                  fw1, fb1, fw2, fb2,
                  favg, frep,
                  bw1, bn1_s, bn1_b,
                  bw2, bn2_s, bn2_b,
                  o_ref, pbuf, fpad):
    Nb, H, WC = x_ref.shape
    C = fw1.shape[-1]
    f32 = jnp.float32

    x = x_ref[...]                                    # (Nb, H, WC), lane-dense
    x2 = x.reshape(Nb * H, WC)

    # ------------------ TFatten ------------------
    # NOTE: TFatten.x_conv1(x) is computed then immediately overwritten in the
    # torch forward (x_hat is reassigned to bn(x)), so it never affects the
    # output and is skipped here.
    x_hat = x * bn_tfa_s[...] + bn_tfa_b[...]

    # t-branch: mean over H, then two 1-D convs == two banded (WC,WC) matmuls.
    a_t = jnp.mean(x, axis=1)                                          # (Nb, WC)
    a_t = jax.nn.relu(jnp.dot(a_t, tbw1[...], preferred_element_type=f32) + tb1[...])
    a_t = jax.nn.sigmoid(jnp.dot(a_t, tbw2[...], preferred_element_type=f32) + tb2[...])

    # f-branch: mean over W via one (WC,C) matmul, two tiny 1-D convs along H,
    # then channel->lane replication via one (C,WC) matmul.
    a_f = jnp.dot(x2, favg[...], preferred_element_type=f32)           # (Nb*H, C)
    zc = jnp.zeros((Nb, 1, C), f32)
    fpad[:, pl.ds(0, 1), :] = zc
    fpad[:, pl.ds(H + 1, 1), :] = zc
    fpad[:, pl.ds(1, H), :] = a_f.reshape(Nb, H, C)
    acc = jnp.zeros((Nb * H, C), f32)
    for kh in range(3):
        acc = acc + jnp.dot(fpad[:, pl.ds(kh, H), :].reshape(Nb * H, C), fw1[kh],
                            preferred_element_type=f32)
    a_fm = jax.nn.relu(acc + fb1[...])
    fpad[:, pl.ds(1, H), :] = a_fm.reshape(Nb, H, C)
    acc = jnp.zeros((Nb * H, C), f32)
    for kh in range(3):
        acc = acc + jnp.dot(fpad[:, pl.ds(kh, H), :].reshape(Nb * H, C), fw2[kh],
                            preferred_element_type=f32)
    a_fm = jax.nn.sigmoid(acc + fb2[...])                              # (Nb*H, C)
    a_f_full = jnp.dot(a_fm, frep[...], preferred_element_type=f32)    # (Nb*H, WC)

    x_attn = x_hat * a_t[:, None, :] * a_f_full.reshape(Nb, H, WC)     # TFatten out

    # ------------------ residual branch ------------------
    # 3x3 convs: 3 banded (WC,WC) matmuls over H-shifted rows read out of a
    # zero-bordered VMEM scratch (padding in W is folded into the band).
    zrow = jnp.zeros((Nb, 1, WC), f32)
    pbuf[:, pl.ds(0, 1), :] = zrow
    pbuf[:, pl.ds(H + 1, 1), :] = zrow

    pbuf[:, pl.ds(1, H), :] = x_attn
    o1 = jnp.zeros((Nb * H, WC), f32)
    for ky in range(3):
        o1 = o1 + jnp.dot(pbuf[:, pl.ds(ky, H), :].reshape(Nb * H, WC), bw1[ky],
                          preferred_element_type=f32)
    o1 = jax.nn.relu(o1 * bn1_s[...] + bn1_b[...])

    pbuf[:, pl.ds(1, H), :] = o1.reshape(Nb, H, WC)
    o2 = jnp.zeros((Nb * H, WC), f32)
    for ky in range(3):
        o2 = o2 + jnp.dot(pbuf[:, pl.ds(ky, H), :].reshape(Nb * H, WC), bw2[ky],
                          preferred_element_type=f32)
    o2 = o2 * bn2_s[...] + bn2_b[...]

    out = jax.nn.relu(o2 + x_attn.reshape(Nb * H, WC))                 # residual + ReLU
    o_ref[...] = out.reshape(Nb, H, WC).astype(o_ref.dtype)


# ---------------------------------------------------------------------------
# host wrappers
# ---------------------------------------------------------------------------
def _pick_nb(N):
    """Largest images-per-step <= 8 that divides N while keeping >=2 grid steps
    (feeds both v7x TensorCores) when possible."""
    divisors = [d for d in range(1, min(N, 8) + 1) if N % d == 0]
    multi = [d for d in divisors if N // d >= 2]
    return max(multi) if multi else max(divisors)


def _forward_flat(x_flat, kparams):
    """x_flat: (N, H, W*C) float32 -> (N, H, W*C) float32."""
    N, H, WC = x_flat.shape
    C = kparams["fw1"].shape[-1]
    nb = _pick_nb(N)
    grid = (N // nb,)

    operands = [x_flat] + [kparams[k] for k in _PARAM_ORDER]

    def full_spec(a):
        return pl.BlockSpec(a.shape, lambda n, _nd=a.ndim: (0,) * _nd)

    in_specs = [pl.BlockSpec((nb, H, WC), lambda n: (n, 0, 0))]
    in_specs += [full_spec(a) for a in operands[1:]]

    macs = N * (2 * 3 * H * WC * WC        # two 3x3 convs: 3 banded taps each
                + 2 * WC * WC              # two t-branch banded 1-D convs
                + H * WC * C               # mean-over-W matmul
                + H * C * WC               # channel->lane replication matmul
                + 2 * 3 * H * C * C)       # two tiny f-branch 1-D convs
    param_bytes = sum(int(a.size) * a.dtype.itemsize for a in operands[1:])
    io_bytes = 2 * int(x_flat.size) * x_flat.dtype.itemsize
    cost = pl.CostEstimate(flops=int(2 * macs),
                           transcendentals=int(N * (WC + H * C)),
                           bytes_accessed=int(io_bytes + param_bytes))

    return pl.pallas_call(
        _block_kernel,
        out_shape=jax.ShapeDtypeStruct((N, H, WC), jnp.float32),
        grid=grid,
        in_specs=in_specs,
        out_specs=pl.BlockSpec((nb, H, WC), lambda n: (n, 0, 0)),
        scratch_shapes=[pltpu.VMEM((nb, H + 2, WC), jnp.float32),   # padded conv rows
                        pltpu.VMEM((nb, H + 2, C), jnp.float32)],   # padded f-branch
        compiler_params=pltpu.CompilerParams(
            dimension_semantics=("parallel",),
            vmem_limit_bytes=32 * 1024 * 1024),
        cost_estimate=cost,
    )(*operands)


@jax.jit
def custom_basic_block_nhwc(x_nhwc, kparams):
    """NHWC end-to-end entry point (no HBM transpose round trips)."""
    N, H, W, C = x_nhwc.shape
    out = _forward_flat(x_nhwc.astype(jnp.float32).reshape(N, H, W * C), kparams)
    return out.reshape(N, H, W, C)


@jax.jit
def custom_basic_block(x_nchw, kparams):
    """PyTorch-interface wrapper (NCHW in / NCHW out)."""
    x_nhwc = jnp.transpose(x_nchw, (0, 2, 3, 1))
    out = custom_basic_block_nhwc(x_nhwc, kparams)
    return jnp.transpose(out, (0, 3, 1, 2))


# ---------------------------------------------------------------------------
# deterministic parameter initialisation (inplanes == planes, stride=1,
# downsample=None — required for the residual add in the torch module too)
# ---------------------------------------------------------------------------
def _fold_bn(gamma, beta, mean, var, eps=1e-5):
    scale = gamma / jnp.sqrt(var + eps)
    bias = beta - mean * scale
    return scale.reshape(1, -1), bias.reshape(1, -1)


def init_params(key, C):
    ks = jax.random.split(key, 16)

    def nrm(k, shape, s=0.3):
        return s * jax.random.normal(k, shape, jnp.float32)

    def bn_params(k):
        k1, k2, k3, k4 = jax.random.split(k, 4)
        gamma = 1.0 + 0.1 * jax.random.normal(k1, (C,), jnp.float32)
        beta = 0.1 * jax.random.normal(k2, (C,), jnp.float32)
        mean = 0.1 * jax.random.normal(k3, (C,), jnp.float32)
        var = 1.0 + 0.1 * jax.random.uniform(k4, (C,), jnp.float32)
        return _fold_bn(gamma, beta, mean, var)

    p = {}
    p["bn_tfa_s"], p["bn_tfa_b"] = bn_params(ks[0])   # TFatten.bn
    p["bn1_s"], p["bn1_b"] = bn_params(ks[1])         # bn1
    p["bn2_s"], p["bn2_b"] = bn_params(ks[2])         # bn2
    # Conv1d weights stored as (k, Cin, Cout)  (torch (Cout, Cin, k) transposed)
    p["tw1"], p["tb1"] = nrm(ks[3], (3, C, C)), nrm(ks[4], (1, C), 0.1)
    p["tw2"], p["tb2"] = nrm(ks[5], (3, C, C)), nrm(ks[6], (1, C), 0.1)
    p["fw1"], p["fb1"] = nrm(ks[7], (3, C, C)), nrm(ks[8], (1, C), 0.1)
    p["fw2"], p["fb2"] = nrm(ks[9], (3, C, C)), nrm(ks[10], (1, C), 0.1)
    # Conv2d 3x3 weights stored as (ky*3+kx, Cin, Cout)
    p["c1w"] = nrm(ks[11], (9, C, C))
    p["c2w"] = nrm(ks[12], (9, C, C))
    return p


# ---------------------------------------------------------------------------
# pure-JAX reference (mirrors the torch forward, eval-mode BN)
# ---------------------------------------------------------------------------
def reference_forward(x_nchw, params):
    hp = jax.lax.Precision.HIGHEST
    x = jnp.transpose(x_nchw, (0, 2, 3, 1)).astype(jnp.float32)
    N, H, W, C = x.shape
    p = params

    def conv1d(a, w, b):
        L = a.shape[1]
        ap = jnp.pad(a, ((0, 0), (1, 1), (0, 0)))
        out = b[None]                                             # (1, 1, C)
        for k in range(3):
            out = out + jnp.einsum("nlc,cd->nld", ap[:, k:k + L], w[k], precision=hp)
        return out

    def conv2d(xin, w):
        xp = jnp.pad(xin, ((0, 0), (1, 1), (1, 1), (0, 0)))
        out = jnp.zeros_like(xin)
        for ky in range(3):
            for kx in range(3):
                out = out + jnp.einsum("nhwc,cd->nhwd",
                                       xp[:, ky:ky + H, kx:kx + W],
                                       w[ky * 3 + kx], precision=hp)
        return out

    x_hat = x * p["bn_tfa_s"] + p["bn_tfa_b"]
    a_t = jnp.mean(x, axis=1)                                     # (N, W, C)
    a_f = jnp.mean(x, axis=2)                                     # (N, H, C)
    a_t = jax.nn.sigmoid(conv1d(jax.nn.relu(conv1d(a_t, p["tw1"], p["tb1"])), p["tw2"], p["tb2"]))
    a_f = jax.nn.sigmoid(conv1d(jax.nn.relu(conv1d(a_f, p["fw1"], p["fb1"])), p["fw2"], p["fb2"]))
    a_tf = a_t[:, None, :, :] * a_f[:, :, None, :]
    x_attn = a_tf * x_hat

    out = conv2d(x_attn, p["c1w"])
    out = jax.nn.relu(out * p["bn1_s"] + p["bn1_b"])
    out = conv2d(out, p["c2w"])
    out = out * p["bn2_s"] + p["bn2_b"]
    out = jax.nn.relu(out + x_attn)
    return jnp.transpose(out, (0, 3, 1, 2))


# ---------------------------------------------------------------------------
if __name__ == "__main__":
    key = jax.random.PRNGKey(0)
    kx, kp = jax.random.split(key)
    N, C, H, W = 2, 8, 16, 16                                     # W*C = 128 (lane-dense)
    x = jax.random.normal(kx, (N, C, H, W), jnp.float32)          # PyTorch-style NCHW input
    params = init_params(kp, C)
    kernel_params = prepare_kernel_params(params, W)              # one-time weight prep

    out = jax.block_until_ready(custom_basic_block(x, kernel_params))
    ref = jax.block_until_ready(reference_forward(x, params))

    assert out.shape == (N, C, H, W)
    assert bool(jnp.all(jnp.isfinite(out)))
    max_err = float(jnp.max(jnp.abs(out - ref)))
    assert bool(jnp.allclose(out, ref, atol=2e-3, rtol=2e-3)), max_err
    print("KERNEL_OK")
</pallas_src>

<mosaic_0001>
module attributes {stable_mosaic.version = 11 : i64} {
  func.func @_block_kernel(%arg0: i32, %arg1: memref<1x16x128xf32, #tpu.memory_space<vmem>>, %arg2: memref<1x128xf32, #tpu.memory_space<vmem>>, %arg3: memref<1x128xf32, #tpu.memory_space<vmem>>, %arg4: memref<128x128xf32, #tpu.memory_space<vmem>>, %arg5: memref<1x128xf32, #tpu.memory_space<vmem>>, %arg6: memref<128x128xf32, #tpu.memory_space<vmem>>, %arg7: memref<1x128xf32, #tpu.memory_space<vmem>>, %arg8: memref<3x8x8xf32, #tpu.memory_space<vmem>>, %arg9: memref<1x8xf32, #tpu.memory_space<vmem>>, %arg10: memref<3x8x8xf32, #tpu.memory_space<vmem>>, %arg11: memref<1x8xf32, #tpu.memory_space<vmem>>, %arg12: memref<128x8xf32, #tpu.memory_space<vmem>>, %arg13: memref<8x128xf32, #tpu.memory_space<vmem>>, %arg14: memref<3x128x128xf32, #tpu.memory_space<vmem>>, %arg15: memref<1x128xf32, #tpu.memory_space<vmem>>, %arg16: memref<1x128xf32, #tpu.memory_space<vmem>>, %arg17: memref<3x128x128xf32, #tpu.memory_space<vmem>>, %arg18: memref<1x128xf32, #tpu.memory_space<vmem>>, %arg19: memref<1x128xf32, #tpu.memory_space<vmem>>, %arg20: memref<1x16x128xf32, #tpu.memory_space<vmem>>, %arg21: memref<1x18x128xf32, #tpu.memory_space<vmem>>, %arg22: memref<1x18x8xf32, #tpu.memory_space<vmem>>) attributes {dimension_semantics = [#tpu.dimension_semantics<parallel>], iteration_bounds = array<i64: 2>, scalar_prefetch = 0 : i64, scratch_operands = 2 : i64, tpu.core_type = #tpu.core_type<tc>, window_params = [{transform_indices = @transform_0, window_bounds = array<i64: 1, 16, 128>}, {pipeline_mode = #tpu.pipeline_mode<synchronous>, transform_indices = @transform_1, window_bounds = array<i64: 1, 128>}, {pipeline_mode = #tpu.pipeline_mode<synchronous>, transform_indices = @transform_2, window_bounds = array<i64: 1, 128>}, {pipeline_mode = #tpu.pipeline_mode<synchronous>, transform_indices = @transform_3, window_bounds = array<i64: 128, 128>}, {pipeline_mode = #tpu.pipeline_mode<synchronous>, transform_indices = @transform_4, window_bounds = array<i64: 1, 128>}, {pipeline_mode = #tpu.pipeline_mode<synchronous>, transform_indices = @transform_5, window_bounds = array<i64: 128, 128>}, {pipeline_mode = #tpu.pipeline_mode<synchronous>, transform_indices = @transform_6, window_bounds = array<i64: 1, 128>}, {pipeline_mode = #tpu.pipeline_mode<synchronous>, transform_indices = @transform_7, window_bounds = array<i64: 3, 8, 8>}, {pipeline_mode = #tpu.pipeline_mode<synchronous>, transform_indices = @transform_8, window_bounds = array<i64: 1, 8>}, {pipeline_mode = #tpu.pipeline_mode<synchronous>, transform_indices = @transform_9, window_bounds = array<i64: 3, 8, 8>}, {pipeline_mode = #tpu.pipeline_mode<synchronous>, transform_indices = @transform_10, window_bounds = array<i64: 1, 8>}, {pipeline_mode = #tpu.pipeline_mode<synchronous>, transform_indices = @transform_11, window_bounds = array<i64: 128, 8>}, {pipeline_mode = #tpu.pipeline_mode<synchronous>, transform_indices = @transform_12, window_bounds = array<i64: 8, 128>}, {pipeline_mode = #tpu.pipeline_mode<synchronous>, transform_indices = @transform_13, window_bounds = array<i64: 3, 128, 128>}, {pipeline_mode = #tpu.pipeline_mode<synchronous>, transform_indices = @transform_14, window_bounds = array<i64: 1, 128>}, {pipeline_mode = #tpu.pipeline_mode<synchronous>, transform_indices = @transform_15, window_bounds = array<i64: 1, 128>}, {pipeline_mode = #tpu.pipeline_mode<synchronous>, transform_indices = @transform_16, window_bounds = array<i64: 3, 128, 128>}, {pipeline_mode = #tpu.pipeline_mode<synchronous>, transform_indices = @transform_17, window_bounds = array<i64: 1, 128>}, {pipeline_mode = #tpu.pipeline_mode<synchronous>, transform_indices = @transform_18, window_bounds = array<i64: 1, 128>}, {transform_indices = @transform_19, window_bounds = array<i64: 1, 16, 128>}]} {
    %c0 = arith.constant 0 : index
    %c0_0 = arith.constant 0 : index
    %c0_1 = arith.constant 0 : index
    %0 = vector.load %arg1[%c0, %c0_0, %c0_1] : memref<1x16x128xf32, #tpu.memory_space<vmem>>, vector<1x16x128xf32>
    %1 = vector.shape_cast %0 : vector<1x16x128xf32> to vector<16x128xf32>
    %c0_2 = arith.constant 0 : index
    %c0_3 = arith.constant 0 : index
    %2 = vector.load %arg2[%c0_2, %c0_3] : memref<1x128xf32, #tpu.memory_space<vmem>>, vector<1x128xf32>
    %3 = vector.shape_cast %2 : vector<1x128xf32> to vector<1x1x128xf32>
    %4 = vector.broadcast %3 : vector<1x1x128xf32> to vector<1x16x128xf32>
    %5 = arith.mulf %0, %4 : vector<1x16x128xf32>
    %c0_4 = arith.constant 0 : index
    %c0_5 = arith.constant 0 : index
    %6 = vector.load %arg3[%c0_4, %c0_5] : memref<1x128xf32, #tpu.memory_space<vmem>>, vector<1x128xf32>
    %7 = vector.shape_cast %6 : vector<1x128xf32> to vector<1x1x128xf32>
    %8 = vector.broadcast %7 : vector<1x1x128xf32> to vector<1x16x128xf32>
    %9 = arith.addf %5, %8 : vector<1x16x128xf32>
    %cst = arith.constant dense<0.000000e+00> : vector<1x128xf32>
    %10 = vector.multi_reduction <add>, %0, %cst [1] : vector<1x16x128xf32> to vector<1x128xf32>
    %cst_6 = arith.constant 1.600000e+01 : f32
    %11 = vector.broadcast %cst_6 : f32 to vector<1x128xf32>
    %12 = arith.divf %10, %11 : vector<1x128xf32>
    %c0_7 = arith.constant 0 : index
    %c0_8 = arith.constant 0 : index
    %13 = vector.load %arg4[%c0_7, %c0_8] : memref<128x128xf32, #tpu.memory_space<vmem>>, vector<128x128xf32>
    %cst_9 = arith.constant dense<0.000000e+00> : vector<1x128xf32>
    %14 = tpu.matmul %12, %13, %cst_9 {dimension_numbers = #tpu.dot_dimension_numbers<[1], [0], [0], [1], [0, 0, 1, 1], [], []>} : vector<1x128xf32>, vector<128x128xf32>, vector<1x128xf32> -> vector<1x128xf32>
    %c0_10 = arith.constant 0 : index
    %c0_11 = arith.constant 0 : index
    %15 = vector.load %arg5[%c0_10, %c0_11] : memref<1x128xf32, #tpu.memory_space<vmem>>, vector<1x128xf32>
    %16 = arith.addf %14, %15 : vector<1x128xf32>
    %cst_12 = arith.constant 0.000000e+00 : f32
    %17 = vector.broadcast %cst_12 : f32 to vector<1x128xf32>
    %18 = arith.maximumf %16, %17 : vector<1x128xf32>
    %c0_13 = arith.constant 0 : index
    %c0_14 = arith.constant 0 : index
    %19 = vector.load %arg6[%c0_13, %c0_14] : memref<128x128xf32, #tpu.memory_space<vmem>>, vector<128x128xf32>
    %cst_15 = arith.constant dense<0.000000e+00> : vector<1x128xf32>
    %20 = tpu.matmul %18, %19, %cst_15 {dimension_numbers = #tpu.dot_dimension_numbers<[1], [0], [0], [1], [0, 0, 1, 1], [], []>} : vector<1x128xf32>, vector<128x128xf32>, vector<1x128xf32> -> vector<1x128xf32>
    %c0_16 = arith.constant 0 : index
    %c0_17 = arith.constant 0 : index
    %21 = vector.load %arg7[%c0_16, %c0_17] : memref<1x128xf32, #tpu.memory_space<vmem>>, vector<1x128xf32>
    %22 = arith.addf %20, %21 : vector<1x128xf32>
    %23 = arith.negf %22 : vector<1x128xf32>
    %24 = math.exp %23 : vector<1x128xf32>
    %cst_18 = arith.constant 1.000000e+00 : f32
    %25 = vector.broadcast %cst_18 : f32 to vector<1x128xf32>
    %26 = arith.addf %25, %24 : vector<1x128xf32>
    %27 = arith.divf %25, %26 : vector<1x128xf32>
    %c0_19 = arith.constant 0 : index
    %c0_20 = arith.constant 0 : index
    %28 = vector.load %arg12[%c0_19, %c0_20] : memref<128x8xf32, #tpu.memory_space<vmem>>, vector<128x8xf32>
    %cst_21 = arith.constant dense<0.000000e+00> : vector<16x8xf32>
    %29 = tpu.matmul %1, %28, %cst_21 {dimension_numbers = #tpu.dot_dimension_numbers<[1], [0], [0], [1], [0, 0, 1, 1], [], []>} : vector<16x128xf32>, vector<128x8xf32>, vector<16x8xf32> -> vector<16x8xf32>
    %cst_22 = arith.constant 0.000000e+00 : f32
    %30 = vector.broadcast %cst_22 : f32 to vector<1x1x8xf32>
    %c0_23 = arith.constant 0 : index
    %c0_24 = arith.constant 0 : index
    %c0_25 = arith.constant 0 : index
    %31 = vector.load %arg22[%c0_23, %c0_24, %c0_25] : memref<1x18x8xf32, #tpu.memory_space<vmem>>, vector<1x1x8xf32>
    tpu.vector_store %arg22[%c0_23, %c0_24, %c0_25], %30 {strides = array<i32>} : memref<1x18x8xf32, #tpu.memory_space<vmem>>, vector<1x1x8xf32>,
    %c0_26 = arith.constant 0 : index
    %c17 = arith.constant 17 : index
    %c0_27 = arith.constant 0 : index
    %32 = vector.load %arg22[%c0_26, %c17, %c0_27] : memref<1x18x8xf32, #tpu.memory_space<vmem>>, vector<1x1x8xf32>
    tpu.vector_store %arg22[%c0_26, %c17, %c0_27], %30 {strides = array<i32>} : memref<1x18x8xf32, #tpu.memory_space<vmem>>, vector<1x1x8xf32>,
    %33 = vector.shape_cast %29 : vector<16x8xf32> to vector<1x16x8xf32>
    %c0_28 = arith.constant 0 : index
    %c1 = arith.constant 1 : index
    %c0_29 = arith.constant 0 : index
    %34 = vector.load %arg22[%c0_28, %c1, %c0_29] : memref<1x18x8xf32, #tpu.memory_space<vmem>>, vector<1x16x8xf32>
    tpu.vector_store %arg22[%c0_28, %c1, %c0_29], %33 {strides = array<i32>} : memref<1x18x8xf32, #tpu.memory_space<vmem>>, vector<1x16x8xf32>,
    %cst_30 = arith.constant 0.000000e+00 : f32
    %35 = vector.broadcast %cst_30 : f32 to vector<16x8xf32>
    %c0_31 = arith.constant 0 : index
    %c0_32 = arith.constant 0 : index
    %c0_33 = arith.constant 0 : index
    %36 = vector.load %arg22[%c0_31, %c0_32, %c0_33] : memref<1x18x8xf32, #tpu.memory_space<vmem>>, vector<1x16x8xf32>
    %37 = vector.shape_cast %36 : vector<1x16x8xf32> to vector<16x8xf32>
    %c0_34 = arith.constant 0 : index
    %c0_35 = arith.constant 0 : index
    %c0_36 = arith.constant 0 : index
    %38 = vector.load %arg8[%c0_34, %c0_35, %c0_36] : memref<3x8x8xf32, #tpu.memory_space<vmem>>, vector<1x8x8xf32>
    %39 = vector.shape_cast %38 : vector<1x8x8xf32> to vector<8x8xf32>
    %cst_37 = arith.constant dense<0.000000e+00> : vector<16x8xf32>
    %40 = tpu.matmul %37, %39, %cst_37 {dimension_numbers = #tpu.dot_dimension_numbers<[1], [0], [0], [1], [0, 0, 1, 1], [], []>} : vector<16x8xf32>, vector<8x8xf32>, vector<16x8xf32> -> vector<16x8xf32>
    %41 = arith.addf %35, %40 : vector<16x8xf32>
    %c0_38 = arith.constant 0 : index
    %c1_39 = arith.constant 1 : index
    %c0_40 = arith.constant 0 : index
    %42 = vector.load %arg22[%c0_38, %c1_39, %c0_40] : memref<1x18x8xf32, #tpu.memory_space<vmem>>, vector<1x16x8xf32>
    %43 = vector.shape_cast %42 : vector<1x16x8xf32> to vector<16x8xf32>
    %c1_41 = arith.constant 1 : index
    %c0_42 = arith.constant 0 : index
    %c0_43 = arith.constant 0 : index
    %44 = vector.load %arg8[%c1_41, %c0_42, %c0_43] : memref<3x8x8xf32, #tpu.memory_space<vmem>>, vector<1x8x8xf32>
    %45 = vector.shape_cast %44 : vector<1x8x8xf32> to vector<8x8xf32>
    %cst_44 = arith.constant dense<0.000000e+00> : vector<16x8xf32>
    %46 = tpu.matmul %43, %45, %cst_44 {dimension_numbers = #tpu.dot_dimension_numbers<[1], [0], [0], [1], [0, 0, 1, 1], [], []>} : vector<16x8xf32>, vector<8x8xf32>, vector<16x8xf32> -> vector<16x8xf32>
    %47 = arith.addf %41, %46 : vector<16x8xf32>
    %c0_45 = arith.constant 0 : index
    %c2 = arith.constant 2 : index
    %c0_46 = arith.constant 0 : index
    %48 = vector.load %arg22[%c0_45, %c2, %c0_46] : memref<1x18x8xf32, #tpu.memory_space<vmem>>, vector<1x16x8xf32>
    %49 = vector.shape_cast %48 : vector<1x16x8xf32> to vector<16x8xf32>
    %c2_47 = arith.constant 2 : index
    %c0_48 = arith.constant 0 : index
    %c0_49 = arith.constant 0 : index
    %50 = vector.load %arg8[%c2_47, %c0_48, %c0_49] : memref<3x8x8xf32, #tpu.memory_space<vmem>>, vector<1x8x8xf32>
    %51 = vector.shape_cast %50 : vector<1x8x8xf32> to vector<8x8xf32>
    %cst_50 = arith.constant dense<0.000000e+00> : vector<16x8xf32>
    %52 = tpu.matmul %49, %51, %cst_50 {dimension_numbers = #tpu.dot_dimension_numbers<[1], [0], [0], [1], [0, 0, 1, 1], [], []>} : vector<16x8xf32>, vector<8x8xf32>, vector<16x8xf32> -> vector<16x8xf32>
    %53 = arith.addf %47, %52 : vector<16x8xf32>
    %c0_51 = arith.constant 0 : index
    %c0_52 = arith.constant 0 : index
    %54 = vector.load %arg9[%c0_51, %c0_52] : memref<1x8xf32, #tpu.memory_space<vmem>>, vector<1x8xf32>
    %55 = vector.broadcast %54 : vector<1x8xf32> to vector<16x8xf32>
    %56 = arith.addf %53, %55 : vector<16x8xf32>
    %cst_53 = arith.constant 0.000000e+00 : f32
    %57 = vector.broadcast %cst_53 : f32 to vector<16x8xf32>
    %58 = arith.maximumf %56, %57 : vector<16x8xf32>
    %59 = vector.shape_cast %58 : vector<16x8xf32> to vector<1x16x8xf32>
    %c0_54 = arith.constant 0 : index
    %c1_55 = arith.constant 1 : index
    %c0_56 = arith.constant 0 : index
    %60 = vector.load %arg22[%c0_54, %c1_55, %c0_56] : memref<1x18x8xf32, #tpu.memory_space<vmem>>, vector<1x16x8xf32>
    tpu.vector_store %arg22[%c0_54, %c1_55, %c0_56], %59 {strides = array<i32>} : memref<1x18x8xf32, #tpu.memory_space<vmem>>, vector<1x16x8xf32>,
    %cst_57 = arith.constant 0.000000e+00 : f32
    %61 = vector.broadcast %cst_57 : f32 to vector<16x8xf32>
    %c0_58 = arith.constant 0 : index
    %c0_59 = arith.constant 0 : index
    %c0_60 = arith.constant 0 : index
    %62 = vector.load %arg22[%c0_58, %c0_59, %c0_60] : memref<1x18x8xf32, #tpu.memory_space<vmem>>, vector<1x16x8xf32>
    %63 = vector.shape_cast %62 : vector<1x16x8xf32> to vector<16x8xf32>
    %c0_61 = arith.constant 0 : index
    %c0_62 = arith.constant 0 : index
    %c0_63 = arith.constant 0 : index
    %64 = vector.load %arg10[%c0_61, %c0_62, %c0_63] : memref<3x8x8xf32, #tpu.memory_space<vmem>>, vector<1x8x8xf32>
    %65 = vector.shape_cast %64 : vector<1x8x8xf32> to vector<8x8xf32>
    %cst_64 = arith.constant dense<0.000000e+00> : vector<16x8xf32>
    %66 = tpu.matmul %63, %65, %cst_64 {dimension_numbers = #tpu.dot_dimension_numbers<[1], [0], [0], [1], [0, 0, 1, 1], [], []>} : vector<16x8xf32>, vector<8x8xf32>, vector<16x8xf32> -> vector<16x8xf32>
    %67 = arith.addf %61, %66 : vector<16x8xf32>
    %c0_65 = arith.constant 0 : index
    %c1_66 = arith.constant 1 : index
    %c0_67 = arith.constant 0 : index
    %68 = vector.load %arg22[%c0_65, %c1_66, %c0_67] : memref<1x18x8xf32, #tpu.memory_space<vmem>>, vector<1x16x8xf32>
    %69 = vector.shape_cast %68 : vector<1x16x8xf32> to vector<16x8xf32>
    %c1_68 = arith.constant 1 : index
    %c0_69 = arith.constant 0 : index
    %c0_70 = arith.constant 0 : index
    %70 = vector.load %arg10[%c1_68, %c0_69, %c0_70] : memref<3x8x8xf32, #tpu.memory_space<vmem>>, vector<1x8x8xf32>
    %71 = vector.shape_cast %70 : vector<1x8x8xf32> to vector<8x8xf32>
    %cst_71 = arith.constant dense<0.000000e+00> : vector<16x8xf32>
    %72 = tpu.matmul %69, %71, %cst_71 {dimension_numbers = #tpu.dot_dimension_numbers<[1], [0], [0], [1], [0, 0, 1, 1], [], []>} : vector<16x8xf32>, vector<8x8xf32>, vector<16x8xf32> -> vector<16x8xf32>
    %73 = arith.addf %67, %72 : vector<16x8xf32>
    %c0_72 = arith.constant 0 : index
    %c2_73 = arith.constant 2 : index
    %c0_74 = arith.constant 0 : index
    %74 = vector.load %arg22[%c0_72, %c2_73, %c0_74] : memref<1x18x8xf32, #tpu.memory_space<vmem>>, vector<1x16x8xf32>
    %75 = vector.shape_cast %74 : vector<1x16x8xf32> to vector<16x8xf32>
    %c2_75 = arith.constant 2 : index
    %c0_76 = arith.constant 0 : index
    %c0_77 = arith.constant 0 : index
    %76 = vector.load %arg10[%c2_75, %c0_76, %c0_77] : memref<3x8x8xf32, #tpu.memory_space<vmem>>, vector<1x8x8xf32>
    %77 = vector.shape_cast %76 : vector<1x8x8xf32> to vector<8x8xf32>
    %cst_78 = arith.constant dense<0.000000e+00> : vector<16x8xf32>
    %78 = tpu.matmul %75, %77, %cst_78 {dimension_numbers = #tpu.dot_dimension_numbers<[1], [0], [0], [1], [0, 0, 1, 1], [], []>} : vector<16x8xf32>, vector<8x8xf32>, vector<16x8xf32> -> vector<16x8xf32>
    %79 = arith.addf %73, %78 : vector<16x8xf32>
    %c0_79 = arith.constant 0 : index
    %c0_80 = arith.constant 0 : index
    %80 = vector.load %arg11[%c0_79, %c0_80] : memref<1x8xf32, #tpu.memory_space<vmem>>, vector<1x8xf32>
    %81 = vector.broadcast %80 : vector<1x8xf32> to vector<16x8xf32>
    %82 = arith.addf %79, %81 : vector<16x8xf32>
    %83 = arith.negf %82 : vector<16x8xf32>
    %84 = math.exp %83 : vector<16x8xf32>
    %cst_81 = arith.constant 1.000000e+00 : f32
    %85 = vector.broadcast %cst_81 : f32 to vector<16x8xf32>
    %86 = arith.addf %85, %84 : vector<16x8xf32>
    %87 = arith.divf %85, %86 : vector<16x8xf32>
    %c0_82 = arith.constant 0 : index
    %c0_83 = arith.constant 0 : index
    %88 = vector.load %arg13[%c0_82, %c0_83] : memref<8x128xf32, #tpu.memory_space<vmem>>, vector<8x128xf32>
    %cst_84 = arith.constant dense<0.000000e+00> : vector<16x128xf32>
    %89 = tpu.matmul %87, %88, %cst_84 {dimension_numbers = #tpu.dot_dimension_numbers<[1], [0], [0], [1], [0, 0, 1, 1], [], []>} : vector<16x8xf32>, vector<8x128xf32>, vector<16x128xf32> -> vector<16x128xf32>
    %90 = vector.shape_cast %27 : vector<1x128xf32> to vector<1x1x128xf32>
    %91 = vector.broadcast %90 : vector<1x1x128xf32> to vector<1x16x128xf32>
    %92 = arith.mulf %9, %91 : vector<1x16x128xf32>
    %93 = vector.shape_cast %89 : vector<16x128xf32> to vector<1x16x128xf32>
    %94 = arith.mulf %92, %93 : vector<1x16x128xf32>
    %cst_85 = arith.constant 0.000000e+00 : f32
    %95 = vector.broadcast %cst_85 : f32 to vector<1x1x128xf32>
    %c0_86 = arith.constant 0 : index
    %c0_87 = arith.constant 0 : index
    %c0_88 = arith.constant 0 : index
    %96 = vector.load %arg21[%c0_86, %c0_87, %c0_88] : memref<1x18x128xf32, #tpu.memory_space<vmem>>, vector<1x1x128xf32>
    tpu.vector_store %arg21[%c0_86, %c0_87, %c0_88], %95 {strides = array<i32>} : memref<1x18x128xf32, #tpu.memory_space<vmem>>, vector<1x1x128xf32>,
    %c0_89 = arith.constant 0 : index
    %c17_90 = arith.constant 17 : index
    %c0_91 = arith.constant 0 : index
    %97 = vector.load %arg21[%c0_89, %c17_90, %c0_91] : memref<1x18x128xf32, #tpu.memory_space<vmem>>, vector<1x1x128xf32>
    tpu.vector_store %arg21[%c0_89, %c17_90, %c0_91], %95 {strides = array<i32>} : memref<1x18x128xf32, #tpu.memory_space<vmem>>, vector<1x1x128xf32>,
    %c0_92 = arith.constant 0 : index
    %c1_93 = arith.constant 1 : index
    %c0_94 = arith.constant 0 : index
    %98 = vector.load %arg21[%c0_92, %c1_93, %c0_94] : memref<1x18x128xf32, #tpu.memory_space<vmem>>, vector<1x16x128xf32>
    tpu.vector_store %arg21[%c0_92, %c1_93, %c0_94], %94 {strides = array<i32>} : memref<1x18x128xf32, #tpu.memory_space<vmem>>, vector<1x16x128xf32>,
    %cst_95 = arith.constant 0.000000e+00 : f32
    %99 = vector.broadcast %cst_95 : f32 to vector<16x128xf32>
    %c0_96 = arith.constant 0 : index
    %c0_97 = arith.constant 0 : index
    %c0_98 = arith.constant 0 : index
    %100 = vector.load %arg21[%c0_96, %c0_97, %c0_98] : memref<1x18x128xf32, #tpu.memory_space<vmem>>, vector<1x16x128xf32>
    %101 = vector.shape_cast %100 : vector<1x16x128xf32> to vector<16x128xf32>
    %c0_99 = arith.constant 0 : index
    %c0_100 = arith.constant 0 : index
    %c0_101 = arith.constant 0 : index
    %102 = vector.load %arg14[%c0_99, %c0_100, %c0_101] : memref<3x128x128xf32, #tpu.memory_space<vmem>>, vector<1x128x128xf32>
    %103 = vector.shape_cast %102 : vector<1x128x128xf32> to vector<128x128xf32>
    %cst_102 = arith.constant dense<0.000000e+00> : vector<16x128xf32>
    %104 = tpu.matmul %101, %103, %cst_102 {dimension_numbers = #tpu.dot_dimension_numbers<[1], [0], [0], [1], [0, 0, 1, 1], [], []>} : vector<16x128xf32>, vector<128x128xf32>, vector<16x128xf32> -> vector<16x128xf32>
    %105 = arith.addf %99, %104 : vector<16x128xf32>
    %c0_103 = arith.constant 0 : index
    %c1_104 = arith.constant 1 : index
    %c0_105 = arith.constant 0 : index
    %106 = vector.load %arg21[%c0_103, %c1_104, %c0_105] : memref<1x18x128xf32, #tpu.memory_space<vmem>>, vector<1x16x128xf32>
    %107 = vector.shape_cast %106 : vector<1x16x128xf32> to vector<16x128xf32>
    %c1_106 = arith.constant 1 : index
    %c0_107 = arith.constant 0 : index
    %c0_108 = arith.constant 0 : index
    %108 = vector.load %arg14[%c1_106, %c0_107, %c0_108] : memref<3x128x128xf32, #tpu.memory_space<vmem>>, vector<1x128x128xf32>
    %109 = vector.shape_cast %108 : vector<1x128x128xf32> to vector<128x128xf32>
    %cst_109 = arith.constant dense<0.000000e+00> : vector<16x128xf32>
    %110 = tpu.matmul %107, %109, %cst_109 {dimension_numbers = #tpu.dot_dimension_numbers<[1], [0], [0], [1], [0, 0, 1, 1], [], []>} : vector<16x128xf32>, vector<128x128xf32>, vector<16x128xf32> -> vector<16x128xf32>
    %111 = arith.addf %105, %110 : vector<16x128xf32>
    %c0_110 = arith.constant 0 : index
    %c2_111 = arith.constant 2 : index
    %c0_112 = arith.constant 0 : index
    %112 = vector.load %arg21[%c0_110, %c2_111, %c0_112] : memref<1x18x128xf32, #tpu.memory_space<vmem>>, vector<1x16x128xf32>
    %113 = vector.shape_cast %112 : vector<1x16x128xf32> to vector<16x128xf32>
    %c2_113 = arith.constant 2 : index
    %c0_114 = arith.constant 0 : index
    %c0_115 = arith.constant 0 : index
    %114 = vector.load %arg14[%c2_113, %c0_114, %c0_115] : memref<3x128x128xf32, #tpu.memory_space<vmem>>, vector<1x128x128xf32>
    %115 = vector.shape_cast %114 : vector<1x128x128xf32> to vector<128x128xf32>
    %cst_116 = arith.constant dense<0.000000e+00> : vector<16x128xf32>
    %116 = tpu.matmul %113, %115, %cst_116 {dimension_numbers = #tpu.dot_dimension_numbers<[1], [0], [0], [1], [0, 0, 1, 1], [], []>} : vector<16x128xf32>, vector<128x128xf32>, vector<16x128xf32> -> vector<16x128xf32>
    %117 = arith.addf %111, %116 : vector<16x128xf32>
    %c0_117 = arith.constant 0 : index
    %c0_118 = arith.constant 0 : index
    %118 = vector.load %arg15[%c0_117, %c0_118] : memref<1x128xf32, #tpu.memory_space<vmem>>, vector<1x128xf32>
    %119 = vector.broadcast %118 : vector<1x128xf32> to vector<16x128xf32>
    %120 = arith.mulf %117, %119 : vector<16x128xf32>
    %c0_119 = arith.constant 0 : index
    %c0_120 = arith.constant 0 : index
    %121 = vector.load %arg16[%c0_119, %c0_120] : memref<1x128xf32, #tpu.memory_space<vmem>>, vector<1x128xf32>
    %122 = vector.broadcast %121 : vector<1x128xf32> to vector<16x128xf32>
    %123 = arith.addf %120, %122 : vector<16x128xf32>
    %cst_121 = arith.constant 0.000000e+00 : f32
    %124 = vector.broadcast %cst_121 : f32 to vector<16x128xf32>
    %125 = arith.maximumf %123, %124 : vector<16x128xf32>
    %126 = vector.shape_cast %125 : vector<16x128xf32> to vector<1x16x128xf32>
    %c0_122 = arith.constant 0 : index
    %c1_123 = arith.constant 1 : index
    %c0_124 = arith.constant 0 : index
    %127 = vector.load %arg21[%c0_122, %c1_123, %c0_124] : memref<1x18x128xf32, #tpu.memory_space<vmem>>, vector<1x16x128xf32>
    tpu.vector_store %arg21[%c0_122, %c1_123, %c0_124], %126 {strides = array<i32>} : memref<1x18x128xf32, #tpu.memory_space<vmem>>, vector<1x16x128xf32>,
    %cst_125 = arith.constant 0.000000e+00 : f32
    %128 = vector.broadcast %cst_125 : f32 to vector<16x128xf32>
    %c0_126 = arith.constant 0 : index
    %c0_127 = arith.constant 0 : index
    %c0_128 = arith.constant 0 : index
    %129 = vector.load %arg21[%c0_126, %c0_127, %c0_128] : memref<1x18x128xf32, #tpu.memory_space<vmem>>, vector<1x16x128xf32>
    %130 = vector.shape_cast %129 : vector<1x16x128xf32> to vector<16x128xf32>
    %c0_129 = arith.constant 0 : index
    %c0_130 = arith.constant 0 : index
    %c0_131 = arith.constant 0 : index
    %131 = vector.load %arg17[%c0_129, %c0_130, %c0_131] : memref<3x128x128xf32, #tpu.memory_space<vmem>>, vector<1x128x128xf32>
    %132 = vector.shape_cast %131 : vector<1x128x128xf32> to vector<128x128xf32>
    %cst_132 = arith.constant dense<0.000000e+00> : vector<16x128xf32>
    %133 = tpu.matmul %130, %132, %cst_132 {dimension_numbers = #tpu.dot_dimension_numbers<[1], [0], [0], [1], [0, 0, 1, 1], [], []>} : vector<16x128xf32>, vector<128x128xf32>, vector<16x128xf32> -> vector<16x128xf32>
    %134 = arith.addf %128, %133 : vector<16x128xf32>
    %c0_133 = arith.constant 0 : index
    %c1_134 = arith.constant 1 : index
    %c0_135 = arith.constant 0 : index
    %135 = vector.load %arg21[%c0_133, %c1_134, %c0_135] : memref<1x18x128xf32, #tpu.memory_space<vmem>>, vector<1x16x128xf32>
    %136 = vector.shape_cast %135 : vector<1x16x128xf32> to vector<16x128xf32>
    %c1_136 = arith.constant 1 : index
    %c0_137 = arith.constant 0 : index
    %c0_138 = arith.constant 0 : index
    %137 = vector.load %arg17[%c1_136, %c0_137, %c0_138] : memref<3x128x128xf32, #tpu.memory_space<vmem>>, vector<1x128x128xf32>
    %138 = vector.shape_cast %137 : vector<1x128x128xf32> to vector<128x128xf32>
    %cst_139 = arith.constant dense<0.000000e+00> : vector<16x128xf32>
    %139 = tpu.matmul %136, %138, %cst_139 {dimension_numbers = #tpu.dot_dimension_numbers<[1], [0], [0], [1], [0, 0, 1, 1], [], []>} : vector<16x128xf32>, vector<128x128xf32>, vector<16x128xf32> -> vector<16x128xf32>
    %140 = arith.addf %134, %139 : vector<16x128xf32>
    %c0_140 = arith.constant 0 : index
    %c2_141 = arith.constant 2 : index
    %c0_142 = arith.constant 0 : index
    %141 = vector.load %arg21[%c0_140, %c2_141, %c0_142] : memref<1x18x128xf32, #tpu.memory_space<vmem>>, vector<1x16x128xf32>
    %142 = vector.shape_cast %141 : vector<1x16x128xf32> to vector<16x128xf32>
    %c2_143 = arith.constant 2 : index
    %c0_144 = arith.constant 0 : index
    %c0_145 = arith.constant 0 : index
    %143 = vector.load %arg17[%c2_143, %c0_144, %c0_145] : memref<3x128x128xf32, #tpu.memory_space<vmem>>, vector<1x128x128xf32>
    %144 = vector.shape_cast %143 : vector<1x128x128xf32> to vector<128x128xf32>
    %cst_146 = arith.constant dense<0.000000e+00> : vector<16x128xf32>
    %145 = tpu.matmul %142, %144, %cst_146 {dimension_numbers = #tpu.dot_dimension_numbers<[1], [0], [0], [1], [0, 0, 1, 1], [], []>} : vector<16x128xf32>, vector<128x128xf32>, vector<16x128xf32> -> vector<16x128xf32>
    %146 = arith.addf %140, %145 : vector<16x128xf32>
    %c0_147 = arith.constant 0 : index
    %c0_148 = arith.constant 0 : index
    %147 = vector.load %arg18[%c0_147, %c0_148] : memref<1x128xf32, #tpu.memory_space<vmem>>, vector<1x128xf32>
    %148 = vector.broadcast %147 : vector<1x128xf32> to vector<16x128xf32>
    %149 = arith.mulf %146, %148 : vector<16x128xf32>
    %c0_149 = arith.constant 0 : index
    %c0_150 = arith.constant 0 : index
    %150 = vector.load %arg19[%c0_149, %c0_150] : memref<1x128xf32, #tpu.memory_space<vmem>>, vector<1x128xf32>
    %151 = vector.broadcast %150 : vector<1x128xf32> to vector<16x128xf32>
    %152 = arith.addf %149, %151 : vector<16x128xf32>
    %153 = vector.shape_cast %94 : vector<1x16x128xf32> to vector<16x128xf32>
    %154 = arith.addf %152, %153 : vector<16x128xf32>
    %cst_151 = arith.constant 0.000000e+00 : f32
    %155 = vector.broadcast %cst_151 : f32 to vector<16x128xf32>
    %156 = arith.maximumf %154, %155 : vector<16x128xf32>
    %157 = vector.shape_cast %156 : vector<16x128xf32> to vector<1x16x128xf32>
    %c0_152 = arith.constant 0 : index
    %c0_153 = arith.constant 0 : index
    %c0_154 = arith.constant 0 : index
    %158 = vector.load %arg20[%c0_152, %c0_153, %c0_154] : memref<1x16x128xf32, #tpu.memory_space<vmem>>, vector<1x16x128xf32>
    tpu.vector_store %arg20[%c0_152, %c0_153, %c0_154], %157 {strides = array<i32>} : memref<1x16x128xf32, #tpu.memory_space<vmem>>, vector<1x16x128xf32>,
    return
  }
  func.func @transform_0(%arg0: i32) -> (i32, i32, i32) {
    %c0_i32 = arith.constant 0 : i32
    %c0_i32_0 = arith.constant 0 : i32
    %c0_i32_1 = arith.constant 0 : i32
    return %arg0, %c0_i32, %c0_i32_0 : i32, i32, i32
  }
  func.func @transform_1(%arg0: i32) -> (i32, i32) {
    %c0_i32 = arith.constant 0 : i32
    %c0_i32_0 = arith.constant 0 : i32
    %c0_i32_1 = arith.constant 0 : i32
    return %c0_i32, %c0_i32_0 : i32, i32
  }
  func.func @transform_2(%arg0: i32) -> (i32, i32) {
    %c0_i32 = arith.constant 0 : i32
    %c0_i32_0 = arith.constant 0 : i32
    %c0_i32_1 = arith.constant 0 : i32
    return %c0_i32, %c0_i32_0 : i32, i32
  }
  func.func @transform_3(%arg0: i32) -> (i32, i32) {
    %c0_i32 = arith.constant 0 : i32
    %c0_i32_0 = arith.constant 0 : i32
    %c0_i32_1 = arith.constant 0 : i32
    return %c0_i32, %c0_i32_0 : i32, i32
  }
  func.func @transform_4(%arg0: i32) -> (i32, i32) {
    %c0_i32 = arith.constant 0 : i32
    %c0_i32_0 = arith.constant 0 : i32
    %c0_i32_1 = arith.constant 0 : i32
    return %c0_i32, %c0_i32_0 : i32, i32
  }
  func.func @transform_5(%arg0: i32) -> (i32, i32) {
    %c0_i32 = arith.constant 0 : i32
    %c0_i32_0 = arith.constant 0 : i32
    %c0_i32_1 = arith.constant 0 : i32
    return %c0_i32, %c0_i32_0 : i32, i32
  }
  func.func @transform_6(%arg0: i32) -> (i32, i32) {
    %c0_i32 = arith.constant 0 : i32
    %c0_i32_0 = arith.constant 0 : i32
    %c0_i32_1 = arith.constant 0 : i32
    return %c0_i32, %c0_i32_0 : i32, i32
  }
  func.func @transform_7(%arg0: i32) -> (i32, i32, i32) {
    %c0_i32 = arith.constant 0 : i32
    %c0_i32_0 = arith.constant 0 : i32
    %c0_i32_1 = arith.constant 0 : i32
    %c0_i32_2 = arith.constant 0 : i32
    return %c0_i32, %c0_i32_0, %c0_i32_1 : i32, i32, i32
  }
  func.func @transform_8(%arg0: i32) -> (i32, i32) {
    %c0_i32 = arith.constant 0 : i32
    %c0_i32_0 = arith.constant 0 : i32
    %c0_i32_1 = arith.constant 0 : i32
    return %c0_i32, %c0_i32_0 : i32, i32
  }
  func.func @transform_9(%arg0: i32) -> (i32, i32, i32) {
    %c0_i32 = arith.constant 0 : i32
    %c0_i32_0 = arith.constant 0 : i32
    %c0_i32_1 = arith.constant 0 : i32
    %c0_i32_2 = arith.constant 0 : i32
    return %c0_i32, %c0_i32_0, %c0_i32_1 : i32, i32, i32
  }
  func.func @transform_10(%arg0: i32) -> (i32, i32) {
    %c0_i32 = arith.constant 0 : i32
    %c0_i32_0 = arith.constant 0 : i32
    %c0_i32_1 = arith.constant 0 : i32
    return %c0_i32, %c0_i32_0 : i32, i32
  }
  func.func @transform_11(%arg0: i32) -> (i32, i32) {
    %c0_i32 = arith.constant 0 : i32
    %c0_i32_0 = arith.constant 0 : i32
    %c0_i32_1 = arith.constant 0 : i32
    return %c0_i32, %c0_i32_0 : i32, i32
  }
  func.func @transform_12(%arg0: i32) -> (i32, i32) {
    %c0_i32 = arith.constant 0 : i32
    %c0_i32_0 = arith.constant 0 : i32
    %c0_i32_1 = arith.constant 0 : i32
    return %c0_i32, %c0_i32_0 : i32, i32
  }
  func.func @transform_13(%arg0: i32) -> (i32, i32, i32) {
    %c0_i32 = arith.constant 0 : i32
    %c0_i32_0 = arith.constant 0 : i32
    %c0_i32_1 = arith.constant 0 : i32
    %c0_i32_2 = arith.constant 0 : i32
    return %c0_i32, %c0_i32_0, %c0_i32_1 : i32, i32, i32
  }
  func.func @transform_14(%arg0: i32) -> (i32, i32) {
    %c0_i32 = arith.constant 0 : i32
    %c0_i32_0 = arith.constant 0 : i32
    %c0_i32_1 = arith.constant 0 : i32
    return %c0_i32, %c0_i32_0 : i32, i32
  }
  func.func @transform_15(%arg0: i32) -> (i32, i32) {
    %c0_i32 = arith.constant 0 : i32
    %c0_i32_0 = arith.constant 0 : i32
    %c0_i32_1 = arith.constant 0 : i32
    return %c0_i32, %c0_i32_0 : i32, i32
  }
  func.func @transform_16(%arg0: i32) -> (i32, i32, i32) {
    %c0_i32 = arith.constant 0 : i32
    %c0_i32_0 = arith.constant 0 : i32
    %c0_i32_1 = arith.constant 0 : i32
    %c0_i32_2 = arith.constant 0 : i32
    return %c0_i32, %c0_i32_0, %c0_i32_1 : i32, i32, i32
  }
  func.func @transform_17(%arg0: i32) -> (i32, i32) {
    %c0_i32 = arith.constant 0 : i32
    %c0_i32_0 = arith.constant 0 : i32
    %c0_i32_1 = arith.constant 0 : i32
    return %c0_i32, %c0_i32_0 : i32, i32
  }
  func.func @transform_18(%arg0: i32) -> (i32, i32) {
    %c0_i32 = arith.constant 0 : i32
    %c0_i32_0 = arith.constant 0 : i32
    %c0_i32_1 = arith.constant 0 : i32
    return %c0_i32, %c0_i32_0 : i32, i32
  }
  func.func @transform_19(%arg0: i32) -> (i32, i32, i32) {
    %c0_i32 = arith.constant 0 : i32
    %c0_i32_0 = arith.constant 0 : i32
    %c0_i32_1 = arith.constant 0 : i32
    return %arg0, %c0_i32, %c0_i32_0 : i32, i32, i32
  }
}

</mosaic_0001>

<llo_original>
// kernel: custom_basic_block_nhwc.1
$region0: #{custom_basic_block_nhwc.1}
  #allocation0 [shape = 'u32[]', space=smem, size = 0x4, offset = 0x4, fixed_abs, tag = 'smem constant byte address 0x4 - core index']
  #allocation1 [shape = 'u32[144,128]{1,0:T(1,128)}', space=vmem, size = 0x12000, scoped, tag = 'internal scratch']
  #allocation2 [shape = 'f32[1,18,128]{2,1,0:T(8,128)}', space=vmem, size = 0x3000, scoped, tag = 'scratch operand']
  #allocation3 [shape = 'f32[1,18,8]{2,1,0:T(8,128)}', space=vmem, size = 0x3000, scoped, tag = 'scratch operand']
  %s0 = inlined_call_operand.vmem [shape: f32[2,16,128], index: 0, kind: input, shape index: {}]
  %s1 = inlined_call_operand.vmem [shape: f32[1,128], index: 1, kind: input, shape index: {}]
  %s2 = inlined_call_operand.vmem [shape: f32[1,128], index: 2, kind: input, shape index: {}]
  %s3 = inlined_call_operand.vmem [shape: f32[128,128], index: 3, kind: input, shape index: {}]
  %s4 = inlined_call_operand.vmem [shape: f32[1,128], index: 4, kind: input, shape index: {}]
  %s5 = inlined_call_operand.hbm [shape: f32[128,128], index: 5, kind: input, shape index: {}]
  %s6 = inlined_call_operand.vmem [shape: f32[1,128], index: 6, kind: input, shape index: {}]
  %s7 = inlined_call_operand.vmem [shape: f32[3,8,8], index: 7, kind: input, shape index: {}]
  %s8 = inlined_call_operand.hbm [shape: f32[1,8], index: 8, kind: input, shape index: {}]
  %s9 = inlined_call_operand.vmem [shape: f32[3,8,8], index: 9, kind: input, shape index: {}]
  %s10 = inlined_call_operand.hbm [shape: f32[1,8], index: 10, kind: input, shape index: {}]
  %s11 = inlined_call_operand.vmem [shape: f32[128,8], index: 11, kind: input, shape index: {}]
  %s12 = inlined_call_operand.hbm [shape: f32[8,128], index: 12, kind: input, shape index: {}]
  %s13 = inlined_call_operand.vmem [shape: f32[3,128,128], index: 13, kind: input, shape index: {}]
  %s14 = inlined_call_operand.hbm [shape: f32[1,128], index: 14, kind: input, shape index: {}]
  %s15 = inlined_call_operand.hbm [shape: f32[1,128], index: 15, kind: input, shape index: {}]
  %s16 = inlined_call_operand.vmem [shape: f32[3,128,128], index: 16, kind: input, shape index: {}]
  %s17 = inlined_call_operand.hbm [shape: f32[1,128], index: 17, kind: input, shape index: {}]
  %s18 = inlined_call_operand.hbm [shape: f32[1,128], index: 18, kind: input, shape index: {}]
  %s19 = inlined_call_operand.vmem [shape: f32[2,16,128], index: 19, kind: output, shape index: {}]
  %s20 = sld [smem:[#allocation0]]
  $region141: #{custom_basic_block_nhwc.1} parent=0
    _
  %s22 = ssub.s32 1, %s20
  %s23 = scalar_select 0, %s22, %s20
  $region1: #{custom_basic_block_nhwc.1} parent=0
    #allocation4 [shape = 'u8[65536]{0}', space=vmem, size = 0x10000, scoped, tag = 'input window, operand 5, single buffered']
    #allocation5 [shape = 's32[2]{0}', space=sflag, size = 0x8, scoped, tag = 'scoped memory for custom_basic_block_nhwc.1']
    #allocation6 [shape = 'u8[512]{0}', space=vmem, size = 0x400, scoped, tag = 'input window, operand 8, single buffered']
    #allocation7 [shape = 's32[1]{0}', space=sflag, size = 0x4, scoped, tag = 'scoped memory for custom_basic_block_nhwc.1']
    #allocation8 [shape = 'u8[512]{0}', space=vmem, size = 0x400, scoped, tag = 'input window, operand 10, single buffered']
    #allocation9 [shape = 'u8[4096]{0}', space=vmem, size = 0x1000, scoped, tag = 'input window, operand 12, single buffered']
    #allocation10 [shape = 's32[1]{0}', space=sflag, size = 0x4, scoped, tag = 'scoped memory for custom_basic_block_nhwc.1']
    #allocation11 [shape = 'u8[512]{0}', space=vmem, size = 0x400, scoped, tag = 'input window, operand 14, single buffered']
    #allocation12 [shape = 'u8[512]{0}', space=vmem, size = 0x400, scoped, tag = 'input window, operand 15, single buffered']
    #allocation13 [shape = 's32[1]{0}', space=sflag, size = 0x4, scoped, tag = 'scoped memory for custom_basic_block_nhwc.1']
    #allocation14 [shape = 'u8[512]{0}', space=vmem, size = 0x400, scoped, tag = 'input window, operand 17, single buffered']
    #allocation15 [shape = 'u8[512]{0}', space=vmem, size = 0x400, scoped, tag = 'input window, operand 18, single buffered']
    #allocation16 [shape = 's32[1]{0}', space=sflag, size = 0x4, scoped, tag = 'scoped memory for custom_basic_block_nhwc.1']
    %24 = vsyncpa [#allocation5], 0
    %25 = vsyncpa [#allocation7], 0
    %26 = vsyncpa [#allocation10], 0
    %27 = vsyncpa [#allocation13], 0
    %28 = vsyncpa [#allocation16], 0
    loop: start=0, step=1, limit=4
    $region2: #{custom_basic_block_nhwc.1} parent=1 // loop_pre_header
      _
    $region3: #{custom_basic_block_nhwc.1} parent=1 // loop_header
      %s30 = sphi 0, %s34
      %p31 = scmp.ge.s32.totalorder %s30, 4
      %s40 = sphi 0, %s42
      %s43 = sphi 0, %s40
      %s44 = sphi 0, %s43
      %s60 = sphi 0, %s44
      %s64 = sphi 0, %s64
      %s66 = sphi 0, %s64
      %s67 = sphi 0, %s66
      %s81 = sphi 0, %s67
      %s85 = sphi 0, %s85
      %s87 = sphi 0, %s85
      %s88 = sphi 0, %s87
      %s102 = sphi 0, %s88
      %s106 = sphi 0, %s106
      %s108 = sphi 0, %s106
      %s109 = sphi 0, %s108
      %s123 = sphi 0, %s109
      %s127 = sphi 0, %s127
      %s129 = sphi 0, %s127
      %s130 = sphi 0, %s129
      %s144 = sphi 0, %s130
      %s148 = sphi 0, %s148
      %s150 = sphi 0, %s148
      %s151 = sphi 0, %s150
      %s165 = sphi 0, %s151
      %s169 = sphi 0, %s169
      %s171 = sphi 0, %s169
      %s172 = sphi 0, %s171
      %s186 = sphi 0, %s172
      %s190 = sphi 0, %s190
      %s192 = sphi 0, %s190
      %s193 = sphi 0, %s192
      %s207 = sphi 0, %s193
      %s211 = sphi 0, %s211
      %s213 = sphi 0, %s211
      %s214 = sphi 0, %s213
      %s228 = sphi 0, %s214
      %s232 = sphi 0, %s232
      %s234 = sphi 0, %s232
      %s235 = sphi 0, %s234
      %s249 = sphi 0, %s235
      %s253 = sphi 0, %s253
      %s255 = sphi 0, %s253
      %s256 = sphi 0, %s255
      %s270 = sphi 0, %s256
      %s274 = sphi 0, %s274
      %s276 = sphi 0, %s274
      %s277 = sphi 0, %s276
      %s291 = sphi 0, %s277
      %s295 = sphi 0, %s295
      %s297 = sphi 0, %s295
      %s298 = sphi 0, %s297
      %s312 = sphi 0, %s298
      %s316 = sphi 0, %s316
      %s318 = sphi 0, %s316
      %s319 = sphi 0, %s318
      %s333 = sphi 0, %s319
      %s337 = sphi 0, %s337
      %s339 = sphi 0, %s337
      %s340 = sphi 0, %s339
      %s354 = sphi 0, %s340
      %s358 = sphi 0, %s358
      %s360 = sphi 0, %s358
      %s361 = sphi 0, %s360
      %s375 = sphi 0, %s361
      %s379 = sphi 0, %s379
      %s381 = sphi 0, %s379
      %s382 = sphi 0, %s381
      %s396 = sphi 0, %s382
      %s400 = sphi 0, %s400
      %s402 = sphi 0, %s400
      %s403 = sphi 0, %s402
      %s417 = sphi 0, %s403
      %s421 = sphi 0, %s421
      %s423 = sphi 0, %s421
      %s424 = sphi 0, %s423
      %s438 = sphi 0, %s424
      %s444 = sphi 0, %s446
      %s447 = sphi 0, %s444
      %s448 = sphi 0, %s447
      %s464 = sphi 0, %s448
    $region4: #{custom_basic_block_nhwc.1} parent=1 // loop_header_branch
      %33 = sbr.rel (%p31) target = $region8
    $region5: #{custom_basic_block_nhwc.1} parent=1 // loop_body
      %s35 = ssub.s32 %s30, 1
      %s36 = ssub.s32 %s30, 2
      %s37 = sadd.s32 %s30, 1
      %s38 = ssub.s32 %s30, %s37
      %p39 = scmp.eq.s32.totalorder %s38, 0
      %s41 = sadd.s32 %s40, 1
      %s42 = scalar_select %p39, %s40, %s41
      %p45 = pneg %p39
      %p46 = scmp.eq.s32.totalorder %s30, 1
      %p47 = por %p45, %p46
      %p48 = scmp.ne.s32.totalorder %s40, %s43
      %p49 = scmp.eq.s32.totalorder %s30, 0
      %p50 = por %p48, %p49
      %p51 = scmp.ne.s32.totalorder %s40, %s43
      %p52 = scmp.eq.s32.totalorder %s35, 1
      %p53 = por %p51, %p52
      %p54 = scmp.ne.s32.totalorder %s43, %s44
      %p55 = scmp.eq.s32.totalorder %s35, 0
      %p56 = por %p54, %p55
      %p57 = scmp.ne.s32.totalorder %s43, %s44
      %p58 = scmp.eq.s32.totalorder %s36, 1
      %p59 = por %p57, %p58
      %p61 = scmp.ne.s32.totalorder %s44, %s60
      %p62 = scmp.eq.s32.totalorder %s36, 0
      %p63 = por %p61, %p62
      %s65 = sadd.s32 %s64, 1
      %p68 = scmp.eq.s32.totalorder %s30, 1
      %p69 = scmp.ne.s32.totalorder %s64, %s66
      %p70 = scmp.eq.s32.totalorder %s30, 0
      %p71 = por %p69, %p70
      %p72 = scmp.ne.s32.totalorder %s64, %s66
      %p73 = scmp.eq.s32.totalorder %s35, 1
      %p74 = por %p72, %p73
      %p75 = scmp.ne.s32.totalorder %s66, %s67
      %p76 = scmp.eq.s32.totalorder %s35, 0
      %p77 = por %p75, %p76
      %p78 = scmp.ne.s32.totalorder %s66, %s67
      %p79 = scmp.eq.s32.totalorder %s36, 1
      %p80 = por %p78, %p79
      %p82 = scmp.ne.s32.totalorder %s67, %s81
      %p83 = scmp.eq.s32.totalorder %s36, 0
      %p84 = por %p82, %p83
      %s86 = sadd.s32 %s85, 1
      %p89 = scmp.eq.s32.totalorder %s30, 1
      %p90 = scmp.ne.s32.totalorder %s85, %s87
      %p91 = scmp.eq.s32.totalorder %s30, 0
      %p92 = por %p90, %p91
      %p93 = scmp.ne.s32.totalorder %s85, %s87
      %p94 = scmp.eq.s32.totalorder %s35, 1
      %p95 = por %p93, %p94
      %p96 = scmp.ne.s32.totalorder %s87, %s88
      %p97 = scmp.eq.s32.totalorder %s35, 0
      %p98 = por %p96, %p97
      %p99 = scmp.ne.s32.totalorder %s87, %s88
      %p100 = scmp.eq.s32.totalorder %s36, 1
      %p101 = por %p99, %p100
      %p103 = scmp.ne.s32.totalorder %s88, %s102
      %p104 = scmp.eq.s32.totalorder %s36, 0
      %p105 = por %p103, %p104
      %s107 = sadd.s32 %s106, 1
      %p110 = scmp.eq.s32.totalorder %s30, 1
      %p111 = scmp.ne.s32.totalorder %s106, %s108
      %p112 = scmp.eq.s32.totalorder %s30, 0
      %p113 = por %p111, %p112
      %p114 = scmp.ne.s32.totalorder %s106, %s108
      %p115 = scmp.eq.s32.totalorder %s35, 1
      %p116 = por %p114, %p115
      %p117 = scmp.ne.s32.totalorder %s108, %s109
      %p118 = scmp.eq.s32.totalorder %s35, 0
      %p119 = por %p117, %p118
      %p120 = scmp.ne.s32.totalorder %s108, %s109
      %p121 = scmp.eq.s32.totalorder %s36, 1
      %p122 = por %p120, %p121
      %p124 = scmp.ne.s32.totalorder %s109, %s123
      %p125 = scmp.eq.s32.totalorder %s36, 0
      %p126 = por %p124, %p125
      %s128 = sadd.s32 %s127, 1
      %p131 = scmp.eq.s32.totalorder %s30, 1
      %p132 = scmp.ne.s32.totalorder %s127, %s129
      %p133 = scmp.eq.s32.totalorder %s30, 0
      %p134 = por %p132, %p133
      %p135 = scmp.ne.s32.totalorder %s127, %s129
      %p136 = scmp.eq.s32.totalorder %s35, 1
      %p137 = por %p135, %p136
      %p138 = scmp.ne.s32.totalorder %s129, %s130
      %p139 = scmp.eq.s32.totalorder %s35, 0
      %p140 = por %p138, %p139
      %p141 = scmp.ne.s32.totalorder %s129, %s130
      %p142 = scmp.eq.s32.totalorder %s36, 1
      %p143 = por %p141, %p142
      %p145 = scmp.ne.s32.totalorder %s130, %s144
      %p146 = scmp.eq.s32.totalorder %s36, 0
      %p147 = por %p145, %p146
      %s149 = sadd.s32 %s148, 1
      %p152 = scmp.eq.s32.totalorder %s30, 1
      %p153 = scmp.ne.s32.totalorder %s148, %s150
      %p154 = scmp.eq.s32.totalorder %s30, 0
      %p155 = por %p153, %p154
      %p156 = scmp.ne.s32.totalorder %s148, %s150
      %p157 = scmp.eq.s32.totalorder %s35, 1
      %p158 = por %p156, %p157
      %p159 = scmp.ne.s32.totalorder %s150, %s151
      %p160 = scmp.eq.s32.totalorder %s35, 0
      %p161 = por %p159, %p160
      %p162 = scmp.ne.s32.totalorder %s150, %s151
      %p163 = scmp.eq.s32.totalorder %s36, 1
      %p164 = por %p162, %p163
      %p166 = scmp.ne.s32.totalorder %s151, %s165
      %p167 = scmp.eq.s32.totalorder %s36, 0
      %p168 = por %p166, %p167
      %s170 = sadd.s32 %s169, 1
      %p173 = scmp.eq.s32.totalorder %s30, 1
      %p174 = scmp.ne.s32.totalorder %s169, %s171
      %p175 = scmp.eq.s32.totalorder %s30, 0
      %p176 = por %p174, %p175
      %p177 = scmp.ne.s32.totalorder %s169, %s171
      %p178 = scmp.eq.s32.totalorder %s35, 1
      %p179 = por %p177, %p178
      %p180 = scmp.ne.s32.totalorder %s171, %s172
      %p181 = scmp.eq.s32.totalorder %s35, 0
      %p182 = por %p180, %p181
      %p183 = scmp.ne.s32.totalorder %s171, %s172
      %p184 = scmp.eq.s32.totalorder %s36, 1
      %p185 = por %p183, %p184
      %p187 = scmp.ne.s32.totalorder %s172, %s186
      %p188 = scmp.eq.s32.totalorder %s36, 0
      %p189 = por %p187, %p188
      %s191 = sadd.s32 %s190, 1
      %p194 = scmp.eq.s32.totalorder %s30, 1
      %p195 = scmp.ne.s32.totalorder %s190, %s192
      %p196 = scmp.eq.s32.totalorder %s30, 0
      %p197 = por %p195, %p196
      %p198 = scmp.ne.s32.totalorder %s190, %s192
      %p199 = scmp.eq.s32.totalorder %s35, 1
      %p200 = por %p198, %p199
      %p201 = scmp.ne.s32.totalorder %s192, %s193
      %p202 = scmp.eq.s32.totalorder %s35, 0
      %p203 = por %p201, %p202
      %p204 = scmp.ne.s32.totalorder %s192, %s193
      %p205 = scmp.eq.s32.totalorder %s36, 1
      %p206 = por %p204, %p205
      %p208 = scmp.ne.s32.totalorder %s193, %s207
      %p209 = scmp.eq.s32.totalorder %s36, 0
      %p210 = por %p208, %p209
      %s212 = sadd.s32 %s211, 1
      %p215 = scmp.eq.s32.totalorder %s30, 1
      %p216 = scmp.ne.s32.totalorder %s211, %s213
      %p217 = scmp.eq.s32.totalorder %s30, 0
      %p218 = por %p216, %p217
      %p219 = scmp.ne.s32.totalorder %s211, %s213
      %p220 = scmp.eq.s32.totalorder %s35, 1
      %p221 = por %p219, %p220
      %p222 = scmp.ne.s32.totalorder %s213, %s214
      %p223 = scmp.eq.s32.totalorder %s35, 0
      %p224 = por %p222, %p223
      %p225 = scmp.ne.s32.totalorder %s213, %s214
      %p226 = scmp.eq.s32.totalorder %s36, 1
      %p227 = por %p225, %p226
      %p229 = scmp.ne.s32.totalorder %s214, %s228
      %p230 = scmp.eq.s32.totalorder %s36, 0
      %p231 = por %p229, %p230
      %s233 = sadd.s32 %s232, 1
      %p236 = scmp.eq.s32.totalorder %s30, 1
      %p237 = scmp.ne.s32.totalorder %s232, %s234
      %p238 = scmp.eq.s32.totalorder %s30, 0
      %p239 = por %p237, %p238
      %p240 = scmp.ne.s32.totalorder %s232, %s234
      %p241 = scmp.eq.s32.totalorder %s35, 1
      %p242 = por %p240, %p241
      %p243 = scmp.ne.s32.totalorder %s234, %s235
      %p244 = scmp.eq.s32.totalorder %s35, 0
      %p245 = por %p243, %p244
      %p246 = scmp.ne.s32.totalorder %s234, %s235
      %p247 = scmp.eq.s32.totalorder %s36, 1
      %p248 = por %p246, %p247
      %p250 = scmp.ne.s32.totalorder %s235, %s249
      %p251 = scmp.eq.s32.totalorder %s36, 0
      %p252 = por %p250, %p251
      %s254 = sadd.s32 %s253, 1
      %p257 = scmp.eq.s32.totalorder %s30, 1
      %p258 = scmp.ne.s32.totalorder %s253, %s255
      %p259 = scmp.eq.s32.totalorder %s30, 0
      %p260 = por %p258, %p259
      %p261 = scmp.ne.s32.totalorder %s253, %s255
      %p262 = scmp.eq.s32.totalorder %s35, 1
      %p263 = por %p261, %p262
      %p264 = scmp.ne.s32.totalorder %s255, %s256
      %p265 = scmp.eq.s32.totalorder %s35, 0
      %p266 = por %p264, %p265
      %p267 = scmp.ne.s32.totalorder %s255, %s256
      %p268 = scmp.eq.s32.totalorder %s36, 1
      %p269 = por %p267, %p268
      %p271 = scmp.ne.s32.totalorder %s256, %s270
      %p272 = scmp.eq.s32.totalorder %s36, 0
      %p273 = por %p271, %p272
      %s275 = sadd.s32 %s274, 1
      %p278 = scmp.eq.s32.totalorder %s30, 1
      %p279 = scmp.ne.s32.totalorder %s274, %s276
      %p280 = scmp.eq.s32.totalorder %s30, 0
      %p281 = por %p279, %p280
      %p282 = scmp.ne.s32.totalorder %s274, %s276
      %p283 = scmp.eq.s32.totalorder %s35, 1
      %p284 = por %p282, %p283
      %p285 = scmp.ne.s32.totalorder %s276, %s277
      %p286 = scmp.eq.s32.totalorder %s35, 0
      %p287 = por %p285, %p286
      %p288 = scmp.ne.s32.totalorder %s276, %s277
      %p289 = scmp.eq.s32.totalorder %s36, 1
      %p290 = por %p288, %p289
      %p292 = scmp.ne.s32.totalorder %s277, %s291
      %p293 = scmp.eq.s32.totalorder %s36, 0
      %p294 = por %p292, %p293
      %s296 = sadd.s32 %s295, 1
      %p299 = scmp.eq.s32.totalorder %s30, 1
      %p300 = scmp.ne.s32.totalorder %s295, %s297
      %p301 = scmp.eq.s32.totalorder %s30, 0
      %p302 = por %p300, %p301
      %p303 = scmp.ne.s32.totalorder %s295, %s297
      %p304 = scmp.eq.s32.totalorder %s35, 1
      %p305 = por %p303, %p304
      %p306 = scmp.ne.s32.totalorder %s297, %s298
      %p307 = scmp.eq.s32.totalorder %s35, 0
      %p308 = por %p306, %p307
      %p309 = scmp.ne.s32.totalorder %s297, %s298
      %p310 = scmp.eq.s32.totalorder %s36, 1
      %p311 = por %p309, %p310
      %p313 = scmp.ne.s32.totalorder %s298, %s312
      %p314 = scmp.eq.s32.totalorder %s36, 0
      %p315 = por %p313, %p314
      %s317 = sadd.s32 %s316, 1
      %p320 = scmp.eq.s32.totalorder %s30, 1
      %p321 = scmp.ne.s32.totalorder %s316, %s318
      %p322 = scmp.eq.s32.totalorder %s30, 0
      %p323 = por %p321, %p322
      %p324 = scmp.ne.s32.totalorder %s316, %s318
      %p325 = scmp.eq.s32.totalorder %s35, 1
      %p326 = por %p324, %p325
      %p327 = scmp.ne.s32.totalorder %s318, %s319
      %p328 = scmp.eq.s32.totalorder %s35, 0
      %p329 = por %p327, %p328
      %p330 = scmp.ne.s32.totalorder %s318, %s319
      %p331 = scmp.eq.s32.totalorder %s36, 1
      %p332 = por %p330, %p331
      %p334 = scmp.ne.s32.totalorder %s319, %s333
      %p335 = scmp.eq.s32.totalorder %s36, 0
      %p336 = por %p334, %p335
      %s338 = sadd.s32 %s337, 1
      %p341 = scmp.eq.s32.totalorder %s30, 1
      %p342 = scmp.ne.s32.totalorder %s337, %s339
      %p343 = scmp.eq.s32.totalorder %s30, 0
      %p344 = por %p342, %p343
      %p345 = scmp.ne.s32.totalorder %s337, %s339
      %p346 = scmp.eq.s32.totalorder %s35, 1
      %p347 = por %p345, %p346
      %p348 = scmp.ne.s32.totalorder %s339, %s340
      %p349 = scmp.eq.s32.totalorder %s35, 0
      %p350 = por %p348, %p349
      %p351 = scmp.ne.s32.totalorder %s339, %s340
      %p352 = scmp.eq.s32.totalorder %s36, 1
      %p353 = por %p351, %p352
      %p355 = scmp.ne.s32.totalorder %s340, %s354
      %p356 = scmp.eq.s32.totalorder %s36, 0
      %p357 = por %p355, %p356
      %s359 = sadd.s32 %s358, 1
      %p362 = scmp.eq.s32.totalorder %s30, 1
      %p363 = scmp.ne.s32.totalorder %s358, %s360
      %p364 = scmp.eq.s32.totalorder %s30, 0
      %p365 = por %p363, %p364
      %p366 = scmp.ne.s32.totalorder %s358, %s360
      %p367 = scmp.eq.s32.totalorder %s35, 1
      %p368 = por %p366, %p367
      %p369 = scmp.ne.s32.totalorder %s360, %s361
      %p370 = scmp.eq.s32.totalorder %s35, 0
      %p371 = por %p369, %p370
      %p372 = scmp.ne.s32.totalorder %s360, %s361
      %p373 = scmp.eq.s32.totalorder %s36, 1
      %p374 = por %p372, %p373
      %p376 = scmp.ne.s32.totalorder %s361, %s375
      %p377 = scmp.eq.s32.totalorder %s36, 0
      %p378 = por %p376, %p377
      %s380 = sadd.s32 %s379, 1
      %p383 = scmp.eq.s32.totalorder %s30, 1
      %p384 = scmp.ne.s32.totalorder %s379, %s381
      %p385 = scmp.eq.s32.totalorder %s30, 0
      %p386 = por %p384, %p385
      %p387 = scmp.ne.s32.totalorder %s379, %s381
      %p388 = scmp.eq.s32.totalorder %s35, 1
      %p389 = por %p387, %p388
      %p390 = scmp.ne.s32.totalorder %s381, %s382
      %p391 = scmp.eq.s32.totalorder %s35, 0
      %p392 = por %p390, %p391
      %p393 = scmp.ne.s32.totalorder %s381, %s382
      %p394 = scmp.eq.s32.totalorder %s36, 1
      %p395 = por %p393, %p394
      %p397 = scmp.ne.s32.totalorder %s382, %s396
      %p398 = scmp.eq.s32.totalorder %s36, 0
      %p399 = por %p397, %p398
      %s401 = sadd.s32 %s400, 1
      %p404 = scmp.eq.s32.totalorder %s30, 1
      %p405 = scmp.ne.s32.totalorder %s400, %s402
      %p406 = scmp.eq.s32.totalorder %s30, 0
      %p407 = por %p405, %p406
      %p408 = scmp.ne.s32.totalorder %s400, %s402
      %p409 = scmp.eq.s32.totalorder %s35, 1
      %p410 = por %p408, %p409
      %p411 = scmp.ne.s32.totalorder %s402, %s403
      %p412 = scmp.eq.s32.totalorder %s35, 0
      %p413 = por %p411, %p412
      %p414 = scmp.ne.s32.totalorder %s402, %s403
      %p415 = scmp.eq.s32.totalorder %s36, 1
      %p416 = por %p414, %p415
      %p418 = scmp.ne.s32.totalorder %s403, %s417
      %p419 = scmp.eq.s32.totalorder %s36, 0
      %p420 = por %p418, %p419
      %s422 = sadd.s32 %s421, 1
      %p425 = scmp.eq.s32.totalorder %s30, 1
      %p426 = scmp.ne.s32.totalorder %s421, %s423
      %p427 = scmp.eq.s32.totalorder %s30, 0
      %p428 = por %p426, %p427
      %p429 = scmp.ne.s32.totalorder %s421, %s423
      %p430 = scmp.eq.s32.totalorder %s35, 1
      %p431 = por %p429, %p430
      %p432 = scmp.ne.s32.totalorder %s423, %s424
      %p433 = scmp.eq.s32.totalorder %s35, 0
      %p434 = por %p432, %p433
      %p435 = scmp.ne.s32.totalorder %s423, %s424
      %p436 = scmp.eq.s32.totalorder %s36, 1
      %p437 = por %p435, %p436
      %p439 = scmp.ne.s32.totalorder %s424, %s438
      %p440 = scmp.eq.s32.totalorder %s36, 0
      %p441 = por %p439, %p440
      %s442 = ssub.s32 %s30, %s37
      %p443 = scmp.eq.s32.totalorder %s442, 0
      %s445 = sadd.s32 %s444, 1
      %s446 = scalar_select %p443, %s444, %s445
      %p449 = pneg %p443
      %p450 = scmp.eq.s32.totalorder %s30, 1
      %p451 = por %p449, %p450
      %p452 = scmp.ne.s32.totalorder %s444, %s447
      %p453 = scmp.eq.s32.totalorder %s30, 0
      %p454 = por %p452, %p453
      %p455 = scmp.ne.s32.totalorder %s444, %s447
      %p456 = scmp.eq.s32.totalorder %s35, 1
      %p457 = por %p455, %p456
      %p458 = scmp.ne.s32.totalorder %s447, %s448
      %p459 = scmp.eq.s32.totalorder %s35, 0
      %p460 = por %p458, %p459
      %p461 = scmp.ne.s32.totalorder %s447, %s448
      %p462 = scmp.eq.s32.totalorder %s36, 1
      %p463 = por %p461, %p462
      %p465 = scmp.ne.s32.totalorder %s448, %s464
      %p466 = scmp.eq.s32.totalorder %s36, 0
      %p467 = por %p465, %p466
      %p468 = scmp.le.s32.totalorder 1, %s30
      %p469 = scmp.lt.s32.totalorder %s30, 3
      %p470 = pnand %p468, %p469
      %p471 = pneg %p470
      // Predicated region
      $region9: #{custom_basic_block_nhwc.1} parent=5 // pred_check
        _
      $region10: #{custom_basic_block_nhwc.1} parent=5 // pred_check_branch
        %473 = sbr.rel (%p470) target = $region12
      $region11: #{custom_basic_block_nhwc.1} parent=5 // pred_region
        %s474 = ssub.s32 %s30, 1
        // Predicated region
        $region13: #{custom_basic_block_nhwc.1} parent=11 // pred_check
          %p475 = pneg %p77
        $region14: #{custom_basic_block_nhwc.1} parent=11 // pred_check_branch
          %477 = sbr.rel (%p475) target = $region16
        $region15: #{custom_basic_block_nhwc.1} parent=11 // pred_region
          _
        $region16: #{custom_basic_block_nhwc.1} parent=11 // pred_fallthru
          _
        // Predicated region
        $region17: #{custom_basic_block_nhwc.1} parent=11 // pred_check
          %p478 = pneg %p98
        $region18: #{custom_basic_block_nhwc.1} parent=11 // pred_check_branch
          %480 = sbr.rel (%p478) target = $region20
        $region19: #{custom_basic_block_nhwc.1} parent=11 // pred_region
          _
        $region20: #{custom_basic_block_nhwc.1} parent=11 // pred_fallthru
          _
        // Predicated region
        $region21: #{custom_basic_block_nhwc.1} parent=11 // pred_check
          %p481 = pneg %p119
        $region22: #{custom_basic_block_nhwc.1} parent=11 // pred_check_branch
          %483 = sbr.rel (%p481) target = $region24
        $region23: #{custom_basic_block_nhwc.1} parent=11 // pred_region
          _
        $region24: #{custom_basic_block_nhwc.1} parent=11 // pred_fallthru
          _
        // Predicated region
        $region25: #{custom_basic_block_nhwc.1} parent=11 // pred_check
          %p484 = pneg %p140
        $region26: #{custom_basic_block_nhwc.1} parent=11 // pred_check_branch
          %486 = sbr.rel (%p484) target = $region28
        $region27: #{custom_basic_block_nhwc.1} parent=11 // pred_region
          _
        $region28: #{custom_basic_block_nhwc.1} parent=11 // pred_fallthru
          _
        // Predicated region
        $region29: #{custom_basic_block_nhwc.1} parent=11 // pred_check
          %p487 = pneg %p161
        $region30: #{custom_basic_block_nhwc.1} parent=11 // pred_check_branch
          %489 = sbr.rel (%p487) target = $region32
        $region31: #{custom_basic_block_nhwc.1} parent=11 // pred_region
          %s491 = ssub.s32 2048, 2048
          %492 = vsyncadd [#allocation5], %s491
          %s493 = sshll.u32 [#allocation4], 4
          %s494 = int_to_ptr.vmem [resolvable:$true] %s493
          %499 = dma.hbm_to_vmem [thread:$0]  %s5, 2048, %s494, [#allocation5], 128, 128, 8
        $region32: #{custom_basic_block_nhwc.1} parent=11 // pred_fallthru
          _
        // Predicated region
        $region33: #{custom_basic_block_nhwc.1} parent=11 // pred_check
          %p500 = pneg %p182
        $region34: #{custom_basic_block_nhwc.1} parent=11 // pred_check_branch
          %502 = sbr.rel (%p500) target = $region36
        $region35: #{custom_basic_block_nhwc.1} parent=11 // pred_region
          _
        $region36: #{custom_basic_block_nhwc.1} parent=11 // pred_fallthru
          _
        // Predicated region
        $region37: #{custom_basic_block_nhwc.1} parent=11 // pred_check
          %p503 = pneg %p203
        $region38: #{custom_basic_block_nhwc.1} parent=11 // pred_check_branch
          %505 = sbr.rel (%p503) target = $region40
        $region39: #{custom_basic_block_nhwc.1} parent=11 // pred_region
          _
        $region40: #{custom_basic_block_nhwc.1} parent=11 // pred_fallthru
          _
        // Predicated region
        $region41: #{custom_basic_block_nhwc.1} parent=11 // pred_check
          %p506 = pneg %p224
        $region42: #{custom_basic_block_nhwc.1} parent=11 // pred_check_branch
          %508 = sbr.rel (%p506) target = $region44
        $region43: #{custom_basic_block_nhwc.1} parent=11 // pred_region
          %s510 = ssub.s32 16, 16
          %511 = vsyncadd [#allocation7], %s510
          %s513 = sshll.u32 [#allocation6], 4
          %s514 = int_to_ptr.vmem [resolvable:$true] %s513
          %516 = dma.hbm_to_vmem [thread:$0]  %s8, 16, %s514, [#allocation7]
        $region44: #{custom_basic_block_nhwc.1} parent=11 // pred_fallthru
          _
        // Predicated region
        $region45: #{custom_basic_block_nhwc.1} parent=11 // pred_check
          %p517 = pneg %p245
        $region46: #{custom_basic_block_nhwc.1} parent=11 // pred_check_branch
          %519 = sbr.rel (%p517) target = $region48
        $region47: #{custom_basic_block_nhwc.1} parent=11 // pred_region
          _
        $region48: #{custom_basic_block_nhwc.1} parent=11 // pred_fallthru
          _
        // Predicated region
        $region49: #{custom_basic_block_nhwc.1} parent=11 // pred_check
          %p520 = pneg %p266
        $region50: #{custom_basic_block_nhwc.1} parent=11 // pred_check_branch
          %522 = sbr.rel (%p520) target = $region52
        $region51: #{custom_basic_block_nhwc.1} parent=11 // pred_region
          %s524 = ssub.s32 16, 16
          %525 = vsyncadd [#allocation7], %s524
          %s527 = sshll.u32 [#allocation8], 4
          %s528 = int_to_ptr.vmem [resolvable:$true] %s527
          %530 = dma.hbm_to_vmem [thread:$0]  %s10, 16, %s528, [#allocation7]
        $region52: #{custom_basic_block_nhwc.1} parent=11 // pred_fallthru
          _
        // Predicated region
        $region53: #{custom_basic_block_nhwc.1} parent=11 // pred_check
          %p531 = pneg %p287
        $region54: #{custom_basic_block_nhwc.1} parent=11 // pred_check_branch
          %533 = sbr.rel (%p531) target = $region56
        $region55: #{custom_basic_block_nhwc.1} parent=11 // pred_region
          _
        $region56: #{custom_basic_block_nhwc.1} parent=11 // pred_fallthru
          _
        // Predicated region
        $region57: #{custom_basic_block_nhwc.1} parent=11 // pred_check
          %p534 = pneg %p308
        $region58: #{custom_basic_block_nhwc.1} parent=11 // pred_check_branch
          %536 = sbr.rel (%p534) target = $region60
        $region59: #{custom_basic_block_nhwc.1} parent=11 // pred_region
          %s538 = ssub.s32 128, 128
          %539 = vsyncadd [#allocation10], %s538
          %s541 = sshll.u32 [#allocation9], 4
          %s542 = int_to_ptr.vmem [resolvable:$true] %s541
          %544 = dma.hbm_to_vmem [thread:$0]  %s12, 128, %s542, [#allocation10]
        $region60: #{custom_basic_block_nhwc.1} parent=11 // pred_fallthru
          _
        // Predicated region
        $region61: #{custom_basic_block_nhwc.1} parent=11 // pred_check
          %p545 = pneg %p329
        $region62: #{custom_basic_block_nhwc.1} parent=11 // pred_check_branch
          %547 = sbr.rel (%p545) target = $region64
        $region63: #{custom_basic_block_nhwc.1} parent=11 // pred_region
          _
        $region64: #{custom_basic_block_nhwc.1} parent=11 // pred_fallthru
          _
        // Predicated region
        $region65: #{custom_basic_block_nhwc.1} parent=11 // pred_check
          %p548 = pneg %p350
        $region66: #{custom_basic_block_nhwc.1} parent=11 // pred_check_branch
          %550 = sbr.rel (%p548) target = $region68
        $region67: #{custom_basic_block_nhwc.1} parent=11 // pred_region
          %s552 = ssub.s32 16, 16
          %553 = vsyncadd [#allocation10], %s552
          %s555 = sshll.u32 [#allocation11], 4
          %s556 = int_to_ptr.vmem [resolvable:$true] %s555
          %558 = dma.hbm_to_vmem [thread:$0]  %s14, 16, %s556, [#allocation10]
        $region68: #{custom_basic_block_nhwc.1} parent=11 // pred_fallthru
          _
        // Predicated region
        $region69: #{custom_basic_block_nhwc.1} parent=11 // pred_check
          %p559 = pneg %p371
        $region70: #{custom_basic_block_nhwc.1} parent=11 // pred_check_branch
          %561 = sbr.rel (%p559) target = $region72
        $region71: #{custom_basic_block_nhwc.1} parent=11 // pred_region
          %s563 = ssub.s32 16, 16
          %564 = vsyncadd [#allocation13], %s563
          %s566 = sshll.u32 [#allocation12], 4
          %s567 = int_to_ptr.vmem [resolvable:$true] %s566
          %569 = dma.hbm_to_vmem [thread:$0]  %s15, 16, %s567, [#allocation13]
        $region72: #{custom_basic_block_nhwc.1} parent=11 // pred_fallthru
          _
        // Predicated region
        $region73: #{custom_basic_block_nhwc.1} parent=11 // pred_check
          %p570 = pneg %p392
        $region74: #{custom_basic_block_nhwc.1} parent=11 // pred_check_branch
          %572 = sbr.rel (%p570) target = $region76
        $region75: #{custom_basic_block_nhwc.1} parent=11 // pred_region
          _
        $region76: #{custom_basic_block_nhwc.1} parent=11 // pred_fallthru
          _
        // Predicated region
        $region77: #{custom_basic_block_nhwc.1} parent=11 // pred_check
          %p573 = pneg %p413
        $region78: #{custom_basic_block_nhwc.1} parent=11 // pred_check_branch
          %575 = sbr.rel (%p573) target = $region80
        $region79: #{custom_basic_block_nhwc.1} parent=11 // pred_region
          %s577 = ssub.s32 16, 16
          %578 = vsyncadd [#allocation13], %s577
          %s580 = sshll.u32 [#allocation14], 4
          %s581 = int_to_ptr.vmem [resolvable:$true] %s580
          %583 = dma.hbm_to_vmem [thread:$0]  %s17, 16, %s581, [#allocation13]
        $region80: #{custom_basic_block_nhwc.1} parent=11 // pred_fallthru
          _
        // Predicated region
        $region81: #{custom_basic_block_nhwc.1} parent=11 // pred_check
          %p584 = pneg %p434
        $region82: #{custom_basic_block_nhwc.1} parent=11 // pred_check_branch
          %586 = sbr.rel (%p584) target = $region84
        $region83: #{custom_basic_block_nhwc.1} parent=11 // pred_region
          %s588 = ssub.s32 16, 16
          %589 = vsyncadd [#allocation16], %s588
          %s591 = sshll.u32 [#allocation15], 4
          %s592 = int_to_ptr.vmem [resolvable:$true] %s591
          %594 = dma.hbm_to_vmem [thread:$0]  %s18, 16, %s592, [#allocation16]
        $region84: #{custom_basic_block_nhwc.1} parent=11 // pred_fallthru
          _
      $region12: #{custom_basic_block_nhwc.1} parent=5 // pred_fallthru
        _
      %p595 = scmp.lt.s32.totalorder %s30, 2
      // Predicated region
      $region85: #{custom_basic_block_nhwc.1} parent=5 // pred_check
        %p596 = pneg %p595
      $region86: #{custom_basic_block_nhwc.1} parent=5 // pred_check_branch
        %598 = sbr.rel (%p596) target = $region88
      $region87: #{custom_basic_block_nhwc.1} parent=5 // pred_region
        // Predicated region
        $region89: #{custom_basic_block_nhwc.1} parent=87 // pred_check
          %p599 = pneg %p50
        $region90: #{custom_basic_block_nhwc.1} parent=87 // pred_check_branch
          %601 = sbr.rel (%p599) target = $region92
        $region91: #{custom_basic_block_nhwc.1} parent=87 // pred_region
          %p602 = scmp.lt.s32.totalorder %s30, 1
          %s603 = scalar_select %p602, %s30, 1
          %s604 = smul.addr %s603, 2
          %s605 = smul.addr %s604, 8
          %s606 = scalar_lea.vmem %s0, %s605
        $region92: #{custom_basic_block_nhwc.1} parent=87 // pred_fallthru
          _
      $region88: #{custom_basic_block_nhwc.1} parent=5 // pred_fallthru
        _
      %p607 = scmp.le.s32.totalorder 1, %s30
      %p608 = scmp.lt.s32.totalorder %s30, 3
      %p609 = pnand %p607, %p608
      %p610 = pneg %p609
      // Predicated region
      $region93: #{custom_basic_block_nhwc.1} parent=5 // pred_check
        _
      $region94: #{custom_basic_block_nhwc.1} parent=5 // pred_check_branch
        %612 = sbr.rel (%p609) target = $region96
      $region95: #{custom_basic_block_nhwc.1} parent=5 // pred_region
        %s613 = ssub.s32 %s30, 1
        // Predicated region
        $region97: #{custom_basic_block_nhwc.1} parent=95 // pred_check
          %p614 = pneg %p161
        $region98: #{custom_basic_block_nhwc.1} parent=95 // pred_check_branch
          %616 = sbr.rel (%p614) target = $region100
        $region99: #{custom_basic_block_nhwc.1} parent=95 // pred_region
          %617 = dma.done [#allocation5], 2048
        $region100: #{custom_basic_block_nhwc.1} parent=95 // pred_fallthru
          _
        // Predicated region
        $region101: #{custom_basic_block_nhwc.1} parent=95 // pred_check
          %p618 = pneg %p224
        $region102: #{custom_basic_block_nhwc.1} parent=95 // pred_check_branch
          %620 = sbr.rel (%p618) target = $region104
        $region103: #{custom_basic_block_nhwc.1} parent=95 // pred_region
          %621 = dma.done [#allocation7], 16
        $region104: #{custom_basic_block_nhwc.1} parent=95 // pred_fallthru
          _
        // Predicated region
        $region105: #{custom_basic_block_nhwc.1} parent=95 // pred_check
          %p622 = pneg %p266
        $region106: #{custom_basic_block_nhwc.1} parent=95 // pred_check_branch
          %624 = sbr.rel (%p622) target = $region108
        $region107: #{custom_basic_block_nhwc.1} parent=95 // pred_region
          %625 = dma.done [#allocation7], 16
        $region108: #{custom_basic_block_nhwc.1} parent=95 // pred_fallthru
          _
        // Predicated region
        $region109: #{custom_basic_block_nhwc.1} parent=95 // pred_check
          %p626 = pneg %p308
        $region110: #{custom_basic_block_nhwc.1} parent=95 // pred_check_branch
          %628 = sbr.rel (%p626) target = $region112
        $region111: #{custom_basic_block_nhwc.1} parent=95 // pred_region
          %629 = dma.done [#allocation10], 128
        $region112: #{custom_basic_block_nhwc.1} parent=95 // pred_fallthru
          _
        // Predicated region
        $region113: #{custom_basic_block_nhwc.1} parent=95 // pred_check
          %p630 = pneg %p350
        $region114: #{custom_basic_block_nhwc.1} parent=95 // pred_check_branch
          %632 = sbr.rel (%p630) target = $region116
        $region115: #{custom_basic_block_nhwc.1} parent=95 // pred_region
          %633 = dma.done [#allocation10], 16
        $region116: #{custom_basic_block_nhwc.1} parent=95 // pred_fallthru
          _
        // Predicated region
        $region117: #{custom_basic_block_nhwc.1} parent=95 // pred_check
          %p634 = pneg %p371
        $region118: #{custom_basic_block_nhwc.1} parent=95 // pred_check_branch
          %636 = sbr.rel (%p634) target = $region120
        $region119: #{custom_basic_block_nhwc.1} parent=95 // pred_region
          %637 = dma.done [#allocation13], 16
        $region120: #{custom_basic_block_nhwc.1} parent=95 // pred_fallthru
          _
        // Predicated region
        $region121: #{custom_basic_block_nhwc.1} parent=95 // pred_check
          %p638 = pneg %p413
        $region122: #{custom_basic_block_nhwc.1} parent=95 // pred_check_branch
          %640 = sbr.rel (%p638) target = $region124
        $region123: #{custom_basic_block_nhwc.1} parent=95 // pred_region
          %641 = dma.done [#allocation13], 16
        $region124: #{custom_basic_block_nhwc.1} parent=95 // pred_fallthru
          _
        // Predicated region
        $region125: #{custom_basic_block_nhwc.1} parent=95 // pred_check
          %p642 = pneg %p434
        $region126: #{custom_basic_block_nhwc.1} parent=95 // pred_check_branch
          %644 = sbr.rel (%p642) target = $region128
        $region127: #{custom_basic_block_nhwc.1} parent=95 // pred_region
          %645 = dma.done [#allocation16], 16
        $region128: #{custom_basic_block_nhwc.1} parent=95 // pred_fallthru
          _
        %p646 = scmp.lt.s32.totalorder %s35, 1
        %s647 = scalar_select %p646, %s35, 1
        %s648 = smul.addr %s647, 2
        %s649 = smul.addr %s648, 8
        %s650 = scalar_lea.vmem %s0, %s649
        %p651 = pneg %p56
        %p652 = pneg %p53
        %p653 = pneg %p77
        %p654 = pneg %p74
        %p655 = pneg %p98
        %p656 = pneg %p95
        %p657 = pneg %p119
        %p658 = pneg %p116
        %p659 = pneg %p140
        %p660 = pneg %p137
        %p661 = pneg %p161
        %p662 = pneg %p158
        %p663 = pneg %p182
        %p664 = pneg %p179
        %p665 = pneg %p203
        %p666 = pneg %p200
        %p667 = pneg %p224
        %p668 = pneg %p221
        %p669 = pneg %p245
        %p670 = pneg %p242
        %p671 = pneg %p266
        %p672 = pneg %p263
        %p673 = pneg %p287
        %p674 = pneg %p284
        %p675 = pneg %p308
        %p676 = pneg %p305
        %p677 = pneg %p329
        %p678 = pneg %p326
        %p679 = pneg %p350
        %p680 = pneg %p347
        %p681 = pneg %p371
        %p682 = pneg %p368
        %p683 = pneg %p392
        %p684 = pneg %p389
        %p685 = pneg %p413
        %p686 = pneg %p410
        %p687 = pneg %p434
        %p688 = pneg %p431
        %p689 = pneg %p460
        %p690 = pneg %p457
        %p691 = scmp.lt.s32.totalorder %s35, 1
        %s692 = scalar_select %p691, %s35, 1
        %s693 = smul.addr %s692, 2
        %s694 = smul.addr %s693, 8
        %s695 = scalar_lea.vmem %s19, %s694
        %p696 = scmp.lt.s32.totalorder %s35, 1
        %s697 = scalar_select %p696, %s35, 1
        %s698 = smul.addr %s697, 2
        %s699 = smul.addr %s698, 8
        %s700 = scalar_lea.vmem %s0, %s699
        %p701 = scmp.lt.s32.totalorder %s35, 1
        %s702 = scalar_select %p701, %s35, 1
        %s703 = smul.addr %s702, 2
        %s704 = smul.addr %s703, 8
        %s705 = scalar_lea.vmem %s19, %s704
        %v706 = vld [vmem:[%s700] sm:$0xff]
        %v707 = vld [vmem:[%s700 + $0x8] sm:$0xff]
        %v708 = vld [vmem:[%s1] sm:$0x1]
        %v710 = vlaneseq
        %v711 = vshrl.u32 %v710, 7
        %v712 = vsub.s32 0, %v711
        %v713 = vrot.slane %v708, %v712
        %v715 = vmul.f32 %v706, %v713
        %v716 = vmul.f32 %v707, %v713
        %v717 = vld [vmem:[%s2] sm:$0x1]
        %v719 = vlaneseq
        %v720 = vshrl.u32 %v719, 7
        %v721 = vsub.s32 0, %v720
        %v722 = vrot.slane %v717, %v721
        %v724 = vadd.f32 %v715, %v722
        %v725 = vadd.f32 %v716, %v722
        %v726 = vadd.f32 %v706, %v707
        %v727 = vrot.slane %v726, 4
        %v728 = vadd.f32 %v726, %v727
        %v729 = vrot.slane %v728, 2
        %v730 = vadd.f32 %v728, %v729
        %v731 = vrot.slane %v730, 1
        %v732 = vadd.f32 %v730, %v731
        %v733 = vrcp.pop 16.0
        %v734 = vmul.f32 %v732, %v733
        %v735 = vld [vmem:[%s3] sm:$0xff]
        %v736 = vld [vmem:[%s3 + $0x8] sm:$0xff]
        %v737 = vld [vmem:[%s3 + $0x10] sm:$0xff]
        %v738 = vld [vmem:[%s3 + $0x18] sm:$0xff]
        %v739 = vld [vmem:[%s3 + $0x20] sm:$0xff]
        %v740 = vld [vmem:[%s3 + $0x28] sm:$0xff]
        %v741 = vld [vmem:[%s3 + $0x30] sm:$0xff]
        %v742 = vld [vmem:[%s3 + $0x38] sm:$0xff]
        %v743 = vld [vmem:[%s3 + $0x40] sm:$0xff]
        %v744 = vld [vmem:[%s3 + $0x48] sm:$0xff]
        %v745 = vld [vmem:[%s3 + $0x50] sm:$0xff]
        %v746 = vld [vmem:[%s3 + $0x58] sm:$0xff]
        %v747 = vld [vmem:[%s3 + $0x60] sm:$0xff]
        %v748 = vld [vmem:[%s3 + $0x68] sm:$0xff]
        %v749 = vld [vmem:[%s3 + $0x70] sm:$0xff]
        %v750 = vld [vmem:[%s3 + $0x78] sm:$0xff]
        %v751 = vld [vmem:[%s4] sm:$0x1]
        %752 = vmatprep.subr.mxu0 0.0
        %753 = vmatpush1.msra.mxu0 %v750
        %754 = vmatprep.subr.mxu0 0.0
        %755 = vmatpush1.msra.mxu0 %v749
        %756 = vmatprep.subr.mxu0 0.0
        %757 = vmatpush1.msra.mxu0 %v748
        %758 = vmatprep.subr.mxu0 0.0
        %759 = vmatpush1.msra.mxu0 %v747
        %760 = vmatprep.subr.mxu0 0.0
        %761 = vmatpush1.msra.mxu0 %v746
        %762 = vmatprep.subr.mxu0 0.0
        %763 = vmatpush1.msra.mxu0 %v745
        %764 = vmatprep.subr.mxu0 0.0
        %765 = vmatpush1.msra.mxu0 %v744
        %766 = vmatprep.subr.mxu0 0.0
        %767 = vmatpush1.msra.mxu0 %v743
        %768 = vmatprep.subr.mxu0 0.0
        %769 = vmatpush1.msra.mxu0 %v742
        %770 = vmatprep.subr.mxu0 0.0
        %771 = vmatpush1.msra.mxu0 %v741
        %772 = vmatprep.subr.mxu0 0.0
        %773 = vmatpush1.msra.mxu0 %v740
        %774 = vmatprep.subr.mxu0 0.0
        %775 = vmatpush1.msra.mxu0 %v739
        %776 = vmatprep.subr.mxu0 0.0
        %777 = vmatpush1.msra.mxu0 %v738
        %778 = vmatprep.subr.mxu0 0.0
        %779 = vmatpush1.msra.mxu0 %v737
        %780 = vmatprep.subr.mxu0 0.0
        %781 = vmatpush1.msra.mxu0 %v736
        %782 = vmatprep.subr.mxu0 0.0
        %783 = vmatpush1.msra.mxu0 %v735
        %784 = vmatprep.subr.mxu0 0.0
        %785 = vmatpush2.msra.mxu0 0.0
        %786 = vmatprep.subr.mxu0 0.0
        %787 = vmatpush2.msra.mxu0 0.0
        %788 = vmatprep.subr.mxu0 0.0
        %789 = vmatpush2.msra.mxu0 0.0
        %790 = vmatprep.subr.mxu0 0.0
        %791 = vmatpush2.msra.mxu0 0.0
        %792 = vmatprep.subr.mxu0 0.0
        %793 = vmatpush2.msra.mxu0 0.0
        %794 = vmatprep.subr.mxu0 0.0
        %795 = vmatpush2.msra.mxu0 0.0
        %796 = vmatprep.subr.mxu0 0.0
        %797 = vmatpush2.msra.mxu0 0.0
        %798 = vmatprep.subr.mxu0 0.0
        %799 = vmatpush2.msra.mxu0 0.0
        %800 = vmatprep.subr.mxu0 0.0
        %801 = vmatpush2.msra.mxu0 0.0
        %802 = vmatprep.subr.mxu0 0.0
        %803 = vmatpush2.msra.mxu0 0.0
        %804 = vmatprep.subr.mxu0 0.0
        %805 = vmatpush2.msra.mxu0 0.0
        %806 = vmatprep.subr.mxu0 0.0
        %807 = vmatpush2.msra.mxu0 0.0
        %808 = vmatprep.subr.mxu0 0.0
        %809 = vmatpush2.msra.mxu0 0.0
        %810 = vmatprep.subr.mxu0 0.0
        %811 = vmatpush2.msra.mxu0 0.0
        %812 = vmatprep.subr.mxu0 0.0
        %813 = vmatpush2.msra.mxu0 0.0
        %814 = vmatprep.subr.mxu0 0.0
        %815 = vmatpush2.msra.mxu0 0.0
        %816 = vmatprep.mubr.f32.mxu0 0.0
        %817 = vmatmul.mubr.f32.gmra.mxu0 %v734
        %v818 = vpop.f32.mrf.mxu0
        %v819 = vadd.f32 %v751, %v818
        %v820 = vpop.f32.mrf.mxu0
        %821 = vdwg.mxu0
        %v822 = vmax.f32 %v819, 0.0
        %v823 = vld [vmem:[#allocation4] sm:$0xff]
        %v824 = vld [vmem:[#allocation4 + $0x8] sm:$0xff]
        %v825 = vld [vmem:[#allocation4 + $0x10] sm:$0xff]
        %v826 = vld [vmem:[#allocation4 + $0x18] sm:$0xff]
        %v827 = vld [vmem:[#allocation4 + $0x20] sm:$0xff]
        %v828 = vld [vmem:[#allocation4 + $0x28] sm:$0xff]
        %v829 = vld [vmem:[#allocation4 + $0x30] sm:$0xff]
        %v830 = vld [vmem:[#allocation4 + $0x38] sm:$0xff]
        %v831 = vld [vmem:[#allocation4 + $0x40] sm:$0xff]
        %v832 = vld [vmem:[#allocation4 + $0x48] sm:$0xff]
        %v833 = vld [vmem:[#allocation4 + $0x50] sm:$0xff]
        %v834 = vld [vmem:[#allocation4 + $0x58] sm:$0xff]
        %v835 = vld [vmem:[#allocation4 + $0x60] sm:$0xff]
        %v836 = vld [vmem:[#allocation4 + $0x68] sm:$0xff]
        %v837 = vld [vmem:[#allocation4 + $0x70] sm:$0xff]
        %v838 = vld [vmem:[#allocation4 + $0x78] sm:$0xff]
        %v839 = vld [vmem:[%s6] sm:$0x1]
        %840 = vmatprep.subr.mxu0 0.0
        %841 = vmatpush1.msra.mxu0 %v838
        %842 = vmatprep.subr.mxu0 0.0
        %843 = vmatpush1.msra.mxu0 %v837
        %844 = vmatprep.subr.mxu0 0.0
        %845 = vmatpush1.msra.mxu0 %v836
        %846 = vmatprep.subr.mxu0 0.0
        %847 = vmatpush1.msra.mxu0 %v835
        %848 = vmatprep.subr.mxu0 0.0
        %849 = vmatpush1.msra.mxu0 %v834
        %850 = vmatprep.subr.mxu0 0.0
        %851 = vmatpush1.msra.mxu0 %v833
        %852 = vmatprep.subr.mxu0 0.0
        %853 = vmatpush1.msra.mxu0 %v832
        %854 = vmatprep.subr.mxu0 0.0
        %855 = vmatpush1.msra.mxu0 %v831
        %856 = vmatprep.subr.mxu0 0.0
        %857 = vmatpush1.msra.mxu0 %v830
        %858 = vmatprep.subr.mxu0 0.0
        %859 = vmatpush1.msra.mxu0 %v829
        %860 = vmatprep.subr.mxu0 0.0
        %861 = vmatpush1.msra.mxu0 %v828
        %862 = vmatprep.subr.mxu0 0.0
        %863 = vmatpush1.msra.mxu0 %v827
        %864 = vmatprep.subr.mxu0 0.0
        %865 = vmatpush1.msra.mxu0 %v826
        %866 = vmatprep.subr.mxu0 0.0
        %867 = vmatpush1.msra.mxu0 %v825
        %868 = vmatprep.subr.mxu0 0.0
        %869 = vmatpush1.msra.mxu0 %v824
        %870 = vmatprep.subr.mxu0 0.0
        %871 = vmatpush1.msra.mxu0 %v823
        %872 = vmatprep.subr.mxu0 0.0
        %873 = vmatpush2.msra.mxu0 0.0
        %874 = vmatprep.subr.mxu0 0.0
        %875 = vmatpush2.msra.mxu0 0.0
        %876 = vmatprep.subr.mxu0 0.0
        %877 = vmatpush2.msra.mxu0 0.0
        %878 = vmatprep.subr.mxu0 0.0
        %879 = vmatpush2.msra.mxu0 0.0
        %880 = vmatprep.subr.mxu0 0.0
        %881 = vmatpush2.msra.mxu0 0.0
        %882 = vmatprep.subr.mxu0 0.0
        %883 = vmatpush2.msra.mxu0 0.0
        %884 = vmatprep.subr.mxu0 0.0
        %885 = vmatpush2.msra.mxu0 0.0
        %886 = vmatprep.subr.mxu0 0.0
        %887 = vmatpush2.msra.mxu0 0.0
        %888 = vmatprep.subr.mxu0 0.0
        %889 = vmatpush2.msra.mxu0 0.0
        %890 = vmatprep.subr.mxu0 0.0
        %891 = vmatpush2.msra.mxu0 0.0
        %892 = vmatprep.subr.mxu0 0.0
        %893 = vmatpush2.msra.mxu0 0.0
        %894 = vmatprep.subr.mxu0 0.0
        %895 = vmatpush2.msra.mxu0 0.0
        %896 = vmatprep.subr.mxu0 0.0
        %897 = vmatpush2.msra.mxu0 0.0
        %898 = vmatprep.subr.mxu0 0.0
        %899 = vmatpush2.msra.mxu0 0.0
        %900 = vmatprep.subr.mxu0 0.0
        %901 = vmatpush2.msra.mxu0 0.0
        %902 = vmatprep.subr.mxu0 0.0
        %903 = vmatpush2.msra.mxu0 0.0
        %904 = vmatprep.mubr.f32.mxu0 0.0
        %905 = vmatmul.mubr.f32.gmra.mxu0 %v822
        %v906 = vpop.f32.mrf.mxu0
        %v907 = vadd.f32 %v839, %v906
        %v908 = vpop.f32.mrf.mxu0
        %909 = vdwg.mxu0
        %v910 = vxor.u32 %v907, 2147483648
        %v911 = vmul.f32 %v910, 1.442695
        %v912 = vpow.pop %v911
        %v913 = vadd.f32 %v912, 1.0
        %v914 = vrcp.pop %v913
        %v915 = vmul.f32 1.0, %v914
        %v916 = vld [vmem:[%s11] sm:$0xff]
        %v917 = vld [vmem:[%s11 + $0x8] sm:$0xff]
        %v918 = vld [vmem:[%s11 + $0x10] sm:$0xff]
        %v919 = vld [vmem:[%s11 + $0x18] sm:$0xff]
        %v920 = vld [vmem:[%s11 + $0x20] sm:$0xff]
        %v921 = vld [vmem:[%s11 + $0x28] sm:$0xff]
        %v922 = vld [vmem:[%s11 + $0x30] sm:$0xff]
        %v923 = vld [vmem:[%s11 + $0x38] sm:$0xff]
        %v924 = vld [vmem:[%s11 + $0x40] sm:$0xff]
        %v925 = vld [vmem:[%s11 + $0x48] sm:$0xff]
        %v926 = vld [vmem:[%s11 + $0x50] sm:$0xff]
        %v927 = vld [vmem:[%s11 + $0x58] sm:$0xff]
        %v928 = vld [vmem:[%s11 + $0x60] sm:$0xff]
        %v929 = vld [vmem:[%s11 + $0x68] sm:$0xff]
        %v930 = vld [vmem:[%s11 + $0x70] sm:$0xff]
        %v931 = vld [vmem:[%s11 + $0x78] sm:$0xff]
        %932 = vmatprep.subr.mxu0 0.0
        %933 = vmatpush1.msra.mxu0 %v931
        %934 = vmatprep.subr.mxu0 0.0
        %935 = vmatpush1.msra.mxu0 %v930
        %936 = vmatprep.subr.mxu0 0.0
        %937 = vmatpush1.msra.mxu0 %v929
        %938 = vmatprep.subr.mxu0 0.0
        %939 = vmatpush1.msra.mxu0 %v928
        %940 = vmatprep.subr.mxu0 0.0
        %941 = vmatpush1.msra.mxu0 %v927
        %942 = vmatprep.subr.mxu0 0.0
        %943 = vmatpush1.msra.mxu0 %v926
        %944 = vmatprep.subr.mxu0 0.0
        %945 = vmatpush1.msra.mxu0 %v925
        %946 = vmatprep.subr.mxu0 0.0
        %947 = vmatpush1.msra.mxu0 %v924
        %948 = vmatprep.subr.mxu0 0.0
        %949 = vmatpush1.msra.mxu0 %v923
        %950 = vmatprep.subr.mxu0 0.0
        %951 = vmatpush1.msra.mxu0 %v922
        %952 = vmatprep.subr.mxu0 0.0
        %953 = vmatpush1.msra.mxu0 %v921
        %954 = vmatprep.subr.mxu0 0.0
        %955 = vmatpush1.msra.mxu0 %v920
        %956 = vmatprep.subr.mxu0 0.0
        %957 = vmatpush1.msra.mxu0 %v919
        %958 = vmatprep.subr.mxu0 0.0
        %959 = vmatpush1.msra.mxu0 %v918
        %960 = vmatprep.subr.mxu0 0.0
        %961 = vmatpush1.msra.mxu0 %v917
        %962 = vmatprep.subr.mxu0 0.0
        %963 = vmatpush1.msra.mxu0 %v916
        %964 = vmatprep.subr.mxu0 0.0
        %965 = vmatpush2.msra.mxu0 0.0
        %966 = vmatprep.subr.mxu0 0.0
        %967 = vmatpush2.msra.mxu0 0.0
        %968 = vmatprep.subr.mxu0 0.0
        %969 = vmatpush2.msra.mxu0 0.0
        %970 = vmatprep.subr.mxu0 0.0
        %971 = vmatpush2.msra.mxu0 0.0
        %972 = vmatprep.subr.mxu0 0.0
        %973 = vmatpush2.msra.mxu0 0.0
        %974 = vmatprep.subr.mxu0 0.0
        %975 = vmatpush2.msra.mxu0 0.0
        %976 = vmatprep.subr.mxu0 0.0
        %977 = vmatpush2.msra.mxu0 0.0
        %978 = vmatprep.subr.mxu0 0.0
        %979 = vmatpush2.msra.mxu0 0.0
        %980 = vmatprep.subr.mxu0 0.0
        %981 = vmatpush2.msra.mxu0 0.0
        %982 = vmatprep.subr.mxu0 0.0
        %983 = vmatpush2.msra.mxu0 0.0
        %984 = vmatprep.subr.mxu0 0.0
        %985 = vmatpush2.msra.mxu0 0.0
        %986 = vmatprep.subr.mxu0 0.0
        %987 = vmatpush2.msra.mxu0 0.0
        %988 = vmatprep.subr.mxu0 0.0
        %989 = vmatpush2.msra.mxu0 0.0
        %990 = vmatprep.subr.mxu0 0.0
        %991 = vmatpush2.msra.mxu0 0.0
        %992 = vmatprep.subr.mxu0 0.0
        %993 = vmatpush2.msra.mxu0 0.0
        %994 = vmatprep.subr.mxu0 0.0
        %995 = vmatpush2.msra.mxu0 0.0
        %996 = vmatprep.mubr.f32.mxu0 0.0
        %997 = vmatmul.mubr.f32.gmra.mxu0 %v706
        %v998 = vpop.f32.mrf.mxu0
        %v999 = vadd.f32 0.0, %v998
        %v1000 = vpop.f32.mrf.mxu0
        %1001 = vmatprep.mubr.f32.mxu0 0.0
        %1002 = vmatmul.mubr.f32.gmra.mxu0 %v707
        %v1003 = vpop.f32.mrf.mxu0
        %v1004 = vadd.f32 0.0, %v1003
        %v1005 = vpop.f32.mrf.mxu0
        %1006 = vdwg.mxu0
        %vm1007 = vcmask 57344
        %1008 = vst.msk [vmem:[#allocation3] sm:$0x1] %vm1007, 0.0
        %1009 = vst.msk [vmem:[#allocation3 + $0x11] sm:$0x1] %vm1007, 0.0
        %vm1010 = vcmask 64512
        %1011 = vst.msk [vmem:[#allocation3 + $0x1] sm:$0xff] %vm1010, %v999
        %1012 = vst.msk [vmem:[#allocation3 + $0x9] sm:$0xff] %vm1010, %v1004
        %v1013 = vld [vmem:[#allocation3] sm:$0xff]
        %v1014 = vld [vmem:[#allocation3 + $0x8] sm:$0xff]
        %v1015 = vld [vmem:[%s7] sm:$0xff]
        %v1016 = vld [vmem:[#allocation3 + $0x1] sm:$0xff]
        %v1017 = vld [vmem:[#allocation3 + $0x9] sm:$0xff]
        %s1018 = scalar_lea.vmem %s7, 8
        %v1019 = vld [vmem:[%s1018] sm:$0xff]
        %v1021 = vsel %vm1010, %v1016, 0
        %v1024 = vsel %vm1010, %v1017, 0
        %1026 = vmatprep.subr.mxu0 0.0
        %1027 = vmatpush1.msra.mxu0 0.0
        %1028 = vmatprep.subr.mxu0 0.0
        %1029 = vmatpush1.msra.mxu0 0.0
        %1030 = vmatprep.subr.mxu0 0.0
        %1031 = vmatpush1.msra.mxu0 0.0
        %1032 = vmatprep.subr.mxu0 0.0
        %1033 = vmatpush1.msra.mxu0 0.0
        %1034 = vmatprep.subr.mxu0 0.0
        %1035 = vmatpush1.msra.mxu0 0.0
        %1036 = vmatprep.subr.mxu0 0.0
        %1037 = vmatpush1.msra.mxu0 0.0
        %1038 = vmatprep.subr.mxu0 0.0
        %1039 = vmatpush1.msra.mxu0 0.0
        %1040 = vmatprep.subr.mxu0 0.0
        %1041 = vmatpush1.msra.mxu0 0.0
        %1042 = vmatprep.subr.mxu0 0.0
        %1043 = vmatpush1.msra.mxu0 0.0
        %1044 = vmatprep.subr.mxu0 0.0
        %1045 = vmatpush1.msra.mxu0 0.0
        %1046 = vmatprep.subr.mxu0 0.0
        %1047 = vmatpush1.msra.mxu0 0.0
        %1048 = vmatprep.subr.mxu0 0.0
        %1049 = vmatpush1.msra.mxu0 0.0
        %1050 = vmatprep.subr.mxu0 0.0
        %1051 = vmatpush1.msra.mxu0 0.0
        %1052 = vmatprep.subr.mxu0 0.0
        %1053 = vmatpush1.msra.mxu0 0.0
        %1054 = vmatprep.subr.mxu0 0.0
        %1055 = vmatpush1.msra.mxu0 0.0
        %1056 = vmatprep.subr.mxu0 0.0
        %1057 = vmatpush1.msra.mxu0 %v1019
        %1058 = vmatprep.subr.mxu0 0.0
        %1059 = vmatpush2.msra.mxu0 0.0
        %1060 = vmatprep.subr.mxu0 0.0
        %1061 = vmatpush2.msra.mxu0 0.0
        %1062 = vmatprep.subr.mxu0 0.0
        %1063 = vmatpush2.msra.mxu0 0.0
        %1064 = vmatprep.subr.mxu0 0.0
        %1065 = vmatpush2.msra.mxu0 0.0
        %1066 = vmatprep.subr.mxu0 0.0
        %1067 = vmatpush2.msra.mxu0 0.0
        %1068 = vmatprep.subr.mxu0 0.0
        %1069 = vmatpush2.msra.mxu0 0.0
        %1070 = vmatprep.subr.mxu0 0.0
        %1071 = vmatpush2.msra.mxu0 0.0
        %1072 = vmatprep.subr.mxu0 0.0
        %1073 = vmatpush2.msra.mxu0 0.0
        %1074 = vmatprep.subr.mxu0 0.0
        %1075 = vmatpush2.msra.mxu0 0.0
        %1076 = vmatprep.subr.mxu0 0.0
        %1077 = vmatpush2.msra.mxu0 0.0
        %1078 = vmatprep.subr.mxu0 0.0
        %1079 = vmatpush2.msra.mxu0 0.0
        %1080 = vmatprep.subr.mxu0 0.0
        %1081 = vmatpush2.msra.mxu0 0.0
        %1082 = vmatprep.subr.mxu0 0.0
        %1083 = vmatpush2.msra.mxu0 0.0
        %1084 = vmatprep.subr.mxu0 0.0
        %1085 = vmatpush2.msra.mxu0 0.0
        %1086 = vmatprep.subr.mxu0 0.0
        %1087 = vmatpush2.msra.mxu0 0.0
        %1088 = vmatprep.subr.mxu0 0.0
        %1089 = vmatpush2.msra.mxu0 0.0
        %1090 = vmatprep.mubr.f32.mxu0 0.0
        %1091 = vmatmul.mubr.f32.gmra.mxu0 %v1021
        %v1092 = vpop.f32.mrf.mxu0
        %v1093 = vadd.f32 0.0, %v1092
        %v1094 = vpop.f32.mrf.mxu0
        %1095 = vmatprep.mubr.f32.mxu0 0.0
        %1096 = vmatmul.mubr.f32.gmra.mxu0 %v1024
        %v1097 = vpop.f32.mrf.mxu0
        %v1098 = vadd.f32 0.0, %v1097
        %v1099 = vpop.f32.mrf.mxu0
        %1100 = vdwg.mxu0
        %v1102 = vsel %vm1010, %v1013, 0
        %v1105 = vsel %vm1010, %v1014, 0
        %1107 = vmatprep.subr.mxu0 0.0
        %1108 = vmatpush1.msra.mxu0 0.0
        %1109 = vmatprep.subr.mxu0 0.0
        %1110 = vmatpush1.msra.mxu0 0.0
        %1111 = vmatprep.subr.mxu0 0.0
        %1112 = vmatpush1.msra.mxu0 0.0
        %1113 = vmatprep.subr.mxu0 0.0
        %1114 = vmatpush1.msra.mxu0 0.0
        %1115 = vmatprep.subr.mxu0 0.0
        %1116 = vmatpush1.msra.mxu0 0.0
        %1117 = vmatprep.subr.mxu0 0.0
        %1118 = vmatpush1.msra.mxu0 0.0
        %1119 = vmatprep.subr.mxu0 0.0
        %1120 = vmatpush1.msra.mxu0 0.0
        %1121 = vmatprep.subr.mxu0 0.0
        %1122 = vmatpush1.msra.mxu0 0.0
        %1123 = vmatprep.subr.mxu0 0.0
        %1124 = vmatpush1.msra.mxu0 0.0
        %1125 = vmatprep.subr.mxu0 0.0
        %1126 = vmatpush1.msra.mxu0 0.0
        %1127 = vmatprep.subr.mxu0 0.0
        %1128 = vmatpush1.msra.mxu0 0.0
        %1129 = vmatprep.subr.mxu0 0.0
        %1130 = vmatpush1.msra.mxu0 0.0
        %1131 = vmatprep.subr.mxu0 0.0
        %1132 = vmatpush1.msra.mxu0 0.0
        %1133 = vmatprep.subr.mxu0 0.0
        %1134 = vmatpush1.msra.mxu0 0.0
        %1135 = vmatprep.subr.mxu0 0.0
        %1136 = vmatpush1.msra.mxu0 0.0
        %1137 = vmatprep.subr.mxu0 0.0
        %1138 = vmatpush1.msra.mxu0 %v1015
        %1139 = vmatprep.subr.mxu0 0.0
        %1140 = vmatpush2.msra.mxu0 0.0
        %1141 = vmatprep.subr.mxu0 0.0
        %1142 = vmatpush2.msra.mxu0 0.0
        %1143 = vmatprep.subr.mxu0 0.0
        %1144 = vmatpush2.msra.mxu0 0.0
        %1145 = vmatprep.subr.mxu0 0.0
        %1146 = vmatpush2.msra.mxu0 0.0
        %1147 = vmatprep.subr.mxu0 0.0
        %1148 = vmatpush2.msra.mxu0 0.0
        %1149 = vmatprep.subr.mxu0 0.0
        %1150 = vmatpush2.msra.mxu0 0.0
        %1151 = vmatprep.subr.mxu0 0.0
        %1152 = vmatpush2.msra.mxu0 0.0
        %1153 = vmatprep.subr.mxu0 0.0
        %1154 = vmatpush2.msra.mxu0 0.0
        %1155 = vmatprep.subr.mxu0 0.0
        %1156 = vmatpush2.msra.mxu0 0.0
        %1157 = vmatprep.subr.mxu0 0.0
        %1158 = vmatpush2.msra.mxu0 0.0
        %1159 = vmatprep.subr.mxu0 0.0
        %1160 = vmatpush2.msra.mxu0 0.0
        %1161 = vmatprep.subr.mxu0 0.0
        %1162 = vmatpush2.msra.mxu0 0.0
        %1163 = vmatprep.subr.mxu0 0.0
        %1164 = vmatpush2.msra.mxu0 0.0
        %1165 = vmatprep.subr.mxu0 0.0
        %1166 = vmatpush2.msra.mxu0 0.0
        %1167 = vmatprep.subr.mxu0 0.0
        %1168 = vmatpush2.msra.mxu0 0.0
        %1169 = vmatprep.subr.mxu0 0.0
        %1170 = vmatpush2.msra.mxu0 0.0
        %1171 = vmatprep.mubr.f32.mxu0 0.0
        %1172 = vmatmul.mubr.f32.gmra.mxu0 %v1102
        %v1173 = vpop.f32.mrf.mxu0
        %v1174 = vadd.f32 %v1093, %v1173
        %v1175 = vpop.f32.mrf.mxu0
        %1176 = vmatprep.mubr.f32.mxu0 0.0
        %1177 = vmatmul.mubr.f32.gmra.mxu0 %v1105
        %v1178 = vpop.f32.mrf.mxu0
        %v1179 = vadd.f32 %v1098, %v1178
        %v1180 = vpop.f32.mrf.mxu0
        %1181 = vdwg.mxu0
        %v1182 = vld [vmem:[#allocation3 + $0x2] sm:$0xff]
        %v1183 = vld [vmem:[#allocation3 + $0xa] sm:$0xff]
        %s1184 = scalar_lea.vmem %s7, 16
        %v1185 = vld [vmem:[%s1184] sm:$0xff]
        %v1187 = vsel %vm1010, %v1182, 0
        %v1190 = vsel %vm1010, %v1183, 0
        %1192 = vmatprep.subr.mxu0 0.0
        %1193 = vmatpush1.msra.mxu0 0.0
        %1194 = vmatprep.subr.mxu0 0.0
        %1195 = vmatpush1.msra.mxu0 0.0
        %1196 = vmatprep.subr.mxu0 0.0
        %1197 = vmatpush1.msra.mxu0 0.0
        %1198 = vmatprep.subr.mxu0 0.0
        %1199 = vmatpush1.msra.mxu0 0.0
        %1200 = vmatprep.subr.mxu0 0.0
        %1201 = vmatpush1.msra.mxu0 0.0
        %1202 = vmatprep.subr.mxu0 0.0
        %1203 = vmatpush1.msra.mxu0 0.0
        %1204 = vmatprep.subr.mxu0 0.0
        %1205 = vmatpush1.msra.mxu0 0.0
        %1206 = vmatprep.subr.mxu0 0.0
        %1207 = vmatpush1.msra.mxu0 0.0
        %1208 = vmatprep.subr.mxu0 0.0
        %1209 = vmatpush1.msra.mxu0 0.0
        %1210 = vmatprep.subr.mxu0 0.0
        %1211 = vmatpush1.msra.mxu0 0.0
        %1212 = vmatprep.subr.mxu0 0.0
        %1213 = vmatpush1.msra.mxu0 0.0
        %1214 = vmatprep.subr.mxu0 0.0
        %1215 = vmatpush1.msra.mxu0 0.0
        %1216 = vmatprep.subr.mxu0 0.0
        %1217 = vmatpush1.msra.mxu0 0.0
        %1218 = vmatprep.subr.mxu0 0.0
        %1219 = vmatpush1.msra.mxu0 0.0
        %1220 = vmatprep.subr.mxu0 0.0
        %1221 = vmatpush1.msra.mxu0 0.0
        %1222 = vmatprep.subr.mxu0 0.0
        %1223 = vmatpush1.msra.mxu0 %v1185
        %1224 = vmatprep.subr.mxu0 0.0
        %1225 = vmatpush2.msra.mxu0 0.0
        %1226 = vmatprep.subr.mxu0 0.0
        %1227 = vmatpush2.msra.mxu0 0.0
        %1228 = vmatprep.subr.mxu0 0.0
        %1229 = vmatpush2.msra.mxu0 0.0
        %1230 = vmatprep.subr.mxu0 0.0
        %1231 = vmatpush2.msra.mxu0 0.0
        %1232 = vmatprep.subr.mxu0 0.0
        %1233 = vmatpush2.msra.mxu0 0.0
        %1234 = vmatprep.subr.mxu0 0.0
        %1235 = vmatpush2.msra.mxu0 0.0
        %1236 = vmatprep.subr.mxu0 0.0
        %1237 = vmatpush2.msra.mxu0 0.0
        %1238 = vmatprep.subr.mxu0 0.0
        %1239 = vmatpush2.msra.mxu0 0.0
        %1240 = vmatprep.subr.mxu0 0.0
        %1241 = vmatpush2.msra.mxu0 0.0
        %1242 = vmatprep.subr.mxu0 0.0
        %1243 = vmatpush2.msra.mxu0 0.0
        %1244 = vmatprep.subr.mxu0 0.0
        %1245 = vmatpush2.msra.mxu0 0.0
        %1246 = vmatprep.subr.mxu0 0.0
        %1247 = vmatpush2.msra.mxu0 0.0
        %1248 = vmatprep.subr.mxu0 0.0
        %1249 = vmatpush2.msra.mxu0 0.0
        %1250 = vmatprep.subr.mxu0 0.0
        %1251 = vmatpush2.msra.mxu0 0.0
        %1252 = vmatprep.subr.mxu0 0.0
        %1253 = vmatpush2.msra.mxu0 0.0
        %1254 = vmatprep.subr.mxu0 0.0
        %1255 = vmatpush2.msra.mxu0 0.0
        %1256 = vmatprep.mubr.f32.mxu0 0.0
        %1257 = vmatmul.mubr.f32.gmra.mxu0 %v1187
        %v1258 = vpop.f32.mrf.mxu0
        %v1259 = vadd.f32 0.0, %v1258
        %v1260 = vpop.f32.mrf.mxu0
        %1261 = vmatprep.mubr.f32.mxu0 0.0
        %1262 = vmatmul.mubr.f32.gmra.mxu0 %v1190
        %v1263 = vpop.f32.mrf.mxu0
        %v1264 = vadd.f32 0.0, %v1263
        %v1265 = vpop.f32.mrf.mxu0
        %1266 = vdwg.mxu0
        %v1267 = vadd.f32 %v1174, %v1259
        %v1268 = vadd.f32 %v1179, %v1264
        %v1269 = vld [vmem:[#allocation6] sm:$0x1]
        %v1271 = vlaneseq
        %v1272 = vshrl.u32 %v1271, 7
        %v1273 = vsub.s32 0, %v1272
        %v1274 = vrot.slane %v1269, %v1273
        %v1276 = vadd.f32 %v1267, %v1274
        %v1277 = vadd.f32 %v1268, %v1274
        %v1278 = vmax.f32 %v1276, 0.0
        %v1279 = vmax.f32 %v1277, 0.0
        %1280 = vst.msk [vmem:[#allocation3 + $0x1] sm:$0xff] %vm1010, %v1278
        %1281 = vst.msk [vmem:[#allocation3 + $0x9] sm:$0xff] %vm1010, %v1279
        %v1282 = vld [vmem:[#allocation3] sm:$0xff]
        %v1283 = vld [vmem:[#allocation3 + $0x8] sm:$0xff]
        %v1284 = vld [vmem:[%s9] sm:$0xff]
        %v1285 = vld [vmem:[#allocation3 + $0x1] sm:$0xff]
        %v1286 = vld [vmem:[#allocation3 + $0x9] sm:$0xff]
        %s1287 = scalar_lea.vmem %s9, 8
        %v1288 = vld [vmem:[%s1287] sm:$0xff]
        %v1290 = vsel %vm1010, %v1285, 0
        %v1293 = vsel %vm1010, %v1286, 0
        %1295 = vmatprep.subr.mxu0 0.0
        %1296 = vmatpush1.msra.mxu0 0.0
        %1297 = vmatprep.subr.mxu0 0.0
        %1298 = vmatpush1.msra.mxu0 0.0
        %1299 = vmatprep.subr.mxu0 0.0
        %1300 = vmatpush1.msra.mxu0 0.0
        %1301 = vmatprep.subr.mxu0 0.0
        %1302 = vmatpush1.msra.mxu0 0.0
        %1303 = vmatprep.subr.mxu0 0.0
        %1304 = vmatpush1.msra.mxu0 0.0
        %1305 = vmatprep.subr.mxu0 0.0
        %1306 = vmatpush1.msra.mxu0 0.0
        %1307 = vmatprep.subr.mxu0 0.0
        %1308 = vmatpush1.msra.mxu0 0.0
        %1309 = vmatprep.subr.mxu0 0.0
        %1310 = vmatpush1.msra.mxu0 0.0
        %1311 = vmatprep.subr.mxu0 0.0
        %1312 = vmatpush1.msra.mxu0 0.0
        %1313 = vmatprep.subr.mxu0 0.0
        %1314 = vmatpush1.msra.mxu0 0.0
        %1315 = vmatprep.subr.mxu0 0.0
        %1316 = vmatpush1.msra.mxu0 0.0
        %1317 = vmatprep.subr.mxu0 0.0
        %1318 = vmatpush1.msra.mxu0 0.0
        %1319 = vmatprep.subr.mxu0 0.0
        %1320 = vmatpush1.msra.mxu0 0.0
        %1321 = vmatprep.subr.mxu0 0.0
        %1322 = vmatpush1.msra.mxu0 0.0
        %1323 = vmatprep.subr.mxu0 0.0
        %1324 = vmatpush1.msra.mxu0 0.0
        %1325 = vmatprep.subr.mxu0 0.0
        %1326 = vmatpush1.msra.mxu0 %v1288
        %1327 = vmatprep.subr.mxu0 0.0
        %1328 = vmatpush2.msra.mxu0 0.0
        %1329 = vmatprep.subr.mxu0 0.0
        %1330 = vmatpush2.msra.mxu0 0.0
        %1331 = vmatprep.subr.mxu0 0.0
        %1332 = vmatpush2.msra.mxu0 0.0
        %1333 = vmatprep.subr.mxu0 0.0
        %1334 = vmatpush2.msra.mxu0 0.0
        %1335 = vmatprep.subr.mxu0 0.0
        %1336 = vmatpush2.msra.mxu0 0.0
        %1337 = vmatprep.subr.mxu0 0.0
        %1338 = vmatpush2.msra.mxu0 0.0
        %1339 = vmatprep.subr.mxu0 0.0
        %1340 = vmatpush2.msra.mxu0 0.0
        %1341 = vmatprep.subr.mxu0 0.0
        %1342 = vmatpush2.msra.mxu0 0.0
        %1343 = vmatprep.subr.mxu0 0.0
        %1344 = vmatpush2.msra.mxu0 0.0
        %1345 = vmatprep.subr.mxu0 0.0
        %1346 = vmatpush2.msra.mxu0 0.0
        %1347 = vmatprep.subr.mxu0 0.0
        %1348 = vmatpush2.msra.mxu0 0.0
        %1349 = vmatprep.subr.mxu0 0.0
        %1350 = vmatpush2.msra.mxu0 0.0
        %1351 = vmatprep.subr.mxu0 0.0
        %1352 = vmatpush2.msra.mxu0 0.0
        %1353 = vmatprep.subr.mxu0 0.0
        %1354 = vmatpush2.msra.mxu0 0.0
        %1355 = vmatprep.subr.mxu0 0.0
        %1356 = vmatpush2.msra.mxu0 0.0
        %1357 = vmatprep.subr.mxu0 0.0
        %1358 = vmatpush2.msra.mxu0 0.0
        %1359 = vmatprep.mubr.f32.mxu0 0.0
        %1360 = vmatmul.mubr.f32.gmra.mxu0 %v1290
        %v1361 = vpop.f32.mrf.mxu0
        %v1362 = vadd.f32 0.0, %v1361
        %v1363 = vpop.f32.mrf.mxu0
        %1364 = vmatprep.mubr.f32.mxu0 0.0
        %1365 = vmatmul.mubr.f32.gmra.mxu0 %v1293
        %v1366 = vpop.f32.mrf.mxu0
        %v1367 = vadd.f32 0.0, %v1366
        %v1368 = vpop.f32.mrf.mxu0
        %1369 = vdwg.mxu0
        %v1371 = vsel %vm1010, %v1282, 0
        %v1374 = vsel %vm1010, %v1283, 0
        %1376 = vmatprep.subr.mxu0 0.0
        %1377 = vmatpush1.msra.mxu0 0.0
        %1378 = vmatprep.subr.mxu0 0.0
        %1379 = vmatpush1.msra.mxu0 0.0
        %1380 = vmatprep.subr.mxu0 0.0
        %1381 = vmatpush1.msra.mxu0 0.0
        %1382 = vmatprep.subr.mxu0 0.0
        %1383 = vmatpush1.msra.mxu0 0.0
        %1384 = vmatprep.subr.mxu0 0.0
        %1385 = vmatpush1.msra.mxu0 0.0
        %1386 = vmatprep.subr.mxu0 0.0
        %1387 = vmatpush1.msra.mxu0 0.0
        %1388 = vmatprep.subr.mxu0 0.0
        %1389 = vmatpush1.msra.mxu0 0.0
        %1390 = vmatprep.subr.mxu0 0.0
        %1391 = vmatpush1.msra.mxu0 0.0
        %1392 = vmatprep.subr.mxu0 0.0
        %1393 = vmatpush1.msra.mxu0 0.0
        %1394 = vmatprep.subr.mxu0 0.0
        %1395 = vmatpush1.msra.mxu0 0.0
        %1396 = vmatprep.subr.mxu0 0.0
        %1397 = vmatpush1.msra.mxu0 0.0
        %1398 = vmatprep.subr.mxu0 0.0
        %1399 = vmatpush1.msra.mxu0 0.0
        %1400 = vmatprep.subr.mxu0 0.0
        %1401 = vmatpush1.msra.mxu0 0.0
        %1402 = vmatprep.subr.mxu0 0.0
        %1403 = vmatpush1.msra.mxu0 0.0
        %1404 = vmatprep.subr.mxu0 0.0
        %1405 = vmatpush1.msra.mxu0 0.0
        %1406 = vmatprep.subr.mxu0 0.0
        %1407 = vmatpush1.msra.mxu0 %v1284
        %1408 = vmatprep.subr.mxu0 0.0
        %1409 = vmatpush2.msra.mxu0 0.0
        %1410 = vmatprep.subr.mxu0 0.0
        %1411 = vmatpush2.msra.mxu0 0.0
        %1412 = vmatprep.subr.mxu0 0.0
        %1413 = vmatpush2.msra.mxu0 0.0
        %1414 = vmatprep.subr.mxu0 0.0
        %1415 = vmatpush2.msra.mxu0 0.0
        %1416 = vmatprep.subr.mxu0 0.0
        %1417 = vmatpush2.msra.mxu0 0.0
        %1418 = vmatprep.subr.mxu0 0.0
        %1419 = vmatpush2.msra.mxu0 0.0
        %1420 = vmatprep.subr.mxu0 0.0
        %1421 = vmatpush2.msra.mxu0 0.0
        %1422 = vmatprep.subr.mxu0 0.0
        %1423 = vmatpush2.msra.mxu0 0.0
        %1424 = vmatprep.subr.mxu0 0.0
        %1425 = vmatpush2.msra.mxu0 0.0
        %1426 = vmatprep.subr.mxu0 0.0
        %1427 = vmatpush2.msra.mxu0 0.0
        %1428 = vmatprep.subr.mxu0 0.0
        %1429 = vmatpush2.msra.mxu0 0.0
        %1430 = vmatprep.subr.mxu0 0.0
        %1431 = vmatpush2.msra.mxu0 0.0
        %1432 = vmatprep.subr.mxu0 0.0
        %1433 = vmatpush2.msra.mxu0 0.0
        %1434 = vmatprep.subr.mxu0 0.0
        %1435 = vmatpush2.msra.mxu0 0.0
        %1436 = vmatprep.subr.mxu0 0.0
        %1437 = vmatpush2.msra.mxu0 0.0
        %1438 = vmatprep.subr.mxu0 0.0
        %1439 = vmatpush2.msra.mxu0 0.0
        %1440 = vmatprep.mubr.f32.mxu0 0.0
        %1441 = vmatmul.mubr.f32.gmra.mxu0 %v1371
        %v1442 = vpop.f32.mrf.mxu0
        %v1443 = vadd.f32 %v1362, %v1442
        %v1444 = vpop.f32.mrf.mxu0
        %1445 = vmatprep.mubr.f32.mxu0 0.0
        %1446 = vmatmul.mubr.f32.gmra.mxu0 %v1374
        %v1447 = vpop.f32.mrf.mxu0
        %v1448 = vadd.f32 %v1367, %v1447
        %v1449 = vpop.f32.mrf.mxu0
        %1450 = vdwg.mxu0
        %v1451 = vld [vmem:[#allocation3 + $0x2] sm:$0xff]
        %v1452 = vld [vmem:[#allocation3 + $0xa] sm:$0xff]
        %s1453 = scalar_lea.vmem %s9, 16
        %v1454 = vld [vmem:[%s1453] sm:$0xff]
        %v1456 = vsel %vm1010, %v1451, 0
        %v1459 = vsel %vm1010, %v1452, 0
        %1461 = vmatprep.subr.mxu0 0.0
        %1462 = vmatpush1.msra.mxu0 0.0
        %1463 = vmatprep.subr.mxu0 0.0
        %1464 = vmatpush1.msra.mxu0 0.0
        %1465 = vmatprep.subr.mxu0 0.0
        %1466 = vmatpush1.msra.mxu0 0.0
        %1467 = vmatprep.subr.mxu0 0.0
        %1468 = vmatpush1.msra.mxu0 0.0
        %1469 = vmatprep.subr.mxu0 0.0
        %1470 = vmatpush1.msra.mxu0 0.0
        %1471 = vmatprep.subr.mxu0 0.0
        %1472 = vmatpush1.msra.mxu0 0.0
        %1473 = vmatprep.subr.mxu0 0.0
        %1474 = vmatpush1.msra.mxu0 0.0
        %1475 = vmatprep.subr.mxu0 0.0
        %1476 = vmatpush1.msra.mxu0 0.0
        %1477 = vmatprep.subr.mxu0 0.0
        %1478 = vmatpush1.msra.mxu0 0.0
        %1479 = vmatprep.subr.mxu0 0.0
        %1480 = vmatpush1.msra.mxu0 0.0
        %1481 = vmatprep.subr.mxu0 0.0
        %1482 = vmatpush1.msra.mxu0 0.0
        %1483 = vmatprep.subr.mxu0 0.0
        %1484 = vmatpush1.msra.mxu0 0.0
        %1485 = vmatprep.subr.mxu0 0.0
        %1486 = vmatpush1.msra.mxu0 0.0
        %1487 = vmatprep.subr.mxu0 0.0
        %1488 = vmatpush1.msra.mxu0 0.0
        %1489 = vmatprep.subr.mxu0 0.0
        %1490 = vmatpush1.msra.mxu0 0.0
        %1491 = vmatprep.subr.mxu0 0.0
        %1492 = vmatpush1.msra.mxu0 %v1454
        %1493 = vmatprep.subr.mxu0 0.0
        %1494 = vmatpush2.msra.mxu0 0.0
        %1495 = vmatprep.subr.mxu0 0.0
        %1496 = vmatpush2.msra.mxu0 0.0
        %1497 = vmatprep.subr.mxu0 0.0
        %1498 = vmatpush2.msra.mxu0 0.0
        %1499 = vmatprep.subr.mxu0 0.0
        %1500 = vmatpush2.msra.mxu0 0.0
        %1501 = vmatprep.subr.mxu0 0.0
        %1502 = vmatpush2.msra.mxu0 0.0
        %1503 = vmatprep.subr.mxu0 0.0
        %1504 = vmatpush2.msra.mxu0 0.0
        %1505 = vmatprep.subr.mxu0 0.0
        %1506 = vmatpush2.msra.mxu0 0.0
        %1507 = vmatprep.subr.mxu0 0.0
        %1508 = vmatpush2.msra.mxu0 0.0
        %1509 = vmatprep.subr.mxu0 0.0
        %1510 = vmatpush2.msra.mxu0 0.0
        %1511 = vmatprep.subr.mxu0 0.0
        %1512 = vmatpush2.msra.mxu0 0.0
        %1513 = vmatprep.subr.mxu0 0.0
        %1514 = vmatpush2.msra.mxu0 0.0
        %1515 = vmatprep.subr.mxu0 0.0
        %1516 = vmatpush2.msra.mxu0 0.0
        %1517 = vmatprep.subr.mxu0 0.0
        %1518 = vmatpush2.msra.mxu0 0.0
        %1519 = vmatprep.subr.mxu0 0.0
        %1520 = vmatpush2.msra.mxu0 0.0
        %1521 = vmatprep.subr.mxu0 0.0
        %1522 = vmatpush2.msra.mxu0 0.0
        %1523 = vmatprep.subr.mxu0 0.0
        %1524 = vmatpush2.msra.mxu0 0.0
        %1525 = vmatprep.mubr.f32.mxu0 0.0
        %1526 = vmatmul.mubr.f32.gmra.mxu0 %v1456
        %v1527 = vpop.f32.mrf.mxu0
        %v1528 = vadd.f32 0.0, %v1527
        %v1529 = vpop.f32.mrf.mxu0
        %1530 = vmatprep.mubr.f32.mxu0 0.0
        %1531 = vmatmul.mubr.f32.gmra.mxu0 %v1459
        %v1532 = vpop.f32.mrf.mxu0
        %v1533 = vadd.f32 0.0, %v1532
        %v1534 = vpop.f32.mrf.mxu0
        %1535 = vdwg.mxu0
        %v1536 = vadd.f32 %v1443, %v1528
        %v1537 = vadd.f32 %v1448, %v1533
        %v1538 = vld [vmem:[#allocation8] sm:$0x1]
        %v1540 = vlaneseq
        %v1541 = vshrl.u32 %v1540, 7
        %v1542 = vsub.s32 0, %v1541
        %v1543 = vrot.slane %v1538, %v1542
        %v1545 = vadd.f32 %v1536, %v1543
        %v1546 = vadd.f32 %v1537, %v1543
        %v1547 = vxor.u32 %v1545, 2147483648
        %v1548 = vxor.u32 %v1546, 2147483648
        %v1549 = vmul.f32 %v1547, 1.442695
        %v1550 = vpow.pop %v1549
        %v1551 = vmul.f32 %v1548, 1.442695
        %v1552 = vpow.pop %v1551
        %v1553 = vadd.f32 %v1550, 1.0
        %v1554 = vadd.f32 %v1552, 1.0
        %v1555 = vrcp.pop %v1553
        %v1556 = vmul.f32 1.0, %v1555
        %v1557 = vrcp.pop %v1554
        %v1558 = vmul.f32 1.0, %v1557
        %v1559 = vld [vmem:[#allocation9] sm:$0xff]
        %v1561 = vsel %vm1010, %v1556, 0
        %v1564 = vsel %vm1010, %v1558, 0
        %1566 = vmatprep.subr.mxu0 0.0
        %1567 = vmatpush1.msra.mxu0 0.0
        %1568 = vmatprep.subr.mxu0 0.0
        %1569 = vmatpush1.msra.mxu0 0.0
        %1570 = vmatprep.subr.mxu0 0.0
        %1571 = vmatpush1.msra.mxu0 0.0
        %1572 = vmatprep.subr.mxu0 0.0
        %1573 = vmatpush1.msra.mxu0 0.0
        %1574 = vmatprep.subr.mxu0 0.0
        %1575 = vmatpush1.msra.mxu0 0.0
        %1576 = vmatprep.subr.mxu0 0.0
        %1577 = vmatpush1.msra.mxu0 0.0
        %1578 = vmatprep.subr.mxu0 0.0
        %1579 = vmatpush1.msra.mxu0 0.0
        %1580 = vmatprep.subr.mxu0 0.0
        %1581 = vmatpush1.msra.mxu0 0.0
        %1582 = vmatprep.subr.mxu0 0.0
        %1583 = vmatpush1.msra.mxu0 0.0
        %1584 = vmatprep.subr.mxu0 0.0
        %1585 = vmatpush1.msra.mxu0 0.0
        %1586 = vmatprep.subr.mxu0 0.0
        %1587 = vmatpush1.msra.mxu0 0.0
        %1588 = vmatprep.subr.mxu0 0.0
        %1589 = vmatpush1.msra.mxu0 0.0
        %1590 = vmatprep.subr.mxu0 0.0
        %1591 = vmatpush1.msra.mxu0 0.0
        %1592 = vmatprep.subr.mxu0 0.0
        %1593 = vmatpush1.msra.mxu0 0.0
        %1594 = vmatprep.subr.mxu0 0.0
        %1595 = vmatpush1.msra.mxu0 0.0
        %1596 = vmatprep.subr.mxu0 0.0
        %1597 = vmatpush1.msra.mxu0 %v1559
        %1598 = vmatprep.subr.mxu0 0.0
        %1599 = vmatpush2.msra.mxu0 0.0
        %1600 = vmatprep.subr.mxu0 0.0
        %1601 = vmatpush2.msra.mxu0 0.0
        %1602 = vmatprep.subr.mxu0 0.0
        %1603 = vmatpush2.msra.mxu0 0.0
        %1604 = vmatprep.subr.mxu0 0.0
        %1605 = vmatpush2.msra.mxu0 0.0
        %1606 = vmatprep.subr.mxu0 0.0
        %1607 = vmatpush2.msra.mxu0 0.0
        %1608 = vmatprep.subr.mxu0 0.0
        %1609 = vmatpush2.msra.mxu0 0.0
        %1610 = vmatprep.subr.mxu0 0.0
        %1611 = vmatpush2.msra.mxu0 0.0
        %1612 = vmatprep.subr.mxu0 0.0
        %1613 = vmatpush2.msra.mxu0 0.0
        %1614 = vmatprep.subr.mxu0 0.0
        %1615 = vmatpush2.msra.mxu0 0.0
        %1616 = vmatprep.subr.mxu0 0.0
        %1617 = vmatpush2.msra.mxu0 0.0
        %1618 = vmatprep.subr.mxu0 0.0
        %1619 = vmatpush2.msra.mxu0 0.0
        %1620 = vmatprep.subr.mxu0 0.0
        %1621 = vmatpush2.msra.mxu0 0.0
        %1622 = vmatprep.subr.mxu0 0.0
        %1623 = vmatpush2.msra.mxu0 0.0
        %1624 = vmatprep.subr.mxu0 0.0
        %1625 = vmatpush2.msra.mxu0 0.0
        %1626 = vmatprep.subr.mxu0 0.0
        %1627 = vmatpush2.msra.mxu0 0.0
        %1628 = vmatprep.subr.mxu0 0.0
        %1629 = vmatpush2.msra.mxu0 0.0
        %1630 = vmatprep.mubr.f32.mxu0 0.0
        %1631 = vmatmul.mubr.f32.gmra.mxu0 %v1561
        %v1632 = vpop.f32.mrf.mxu0
        %v1633 = vadd.f32 0.0, %v1632
        %v1634 = vpop.f32.mrf.mxu0
        %1635 = vmatprep.mubr.f32.mxu0 0.0
        %1636 = vmatmul.mubr.f32.gmra.mxu0 %v1564
        %v1637 = vpop.f32.mrf.mxu0
        %v1638 = vadd.f32 0.0, %v1637
        %v1639 = vpop.f32.mrf.mxu0
        %1640 = vdwg.mxu0
        %v1641 = vlaneseq
        %v1642 = vshrl.u32 %v1641, 7
        %v1643 = vsub.s32 0, %v1642
        %v1644 = vrot.slane %v915, %v1643
        %v1645 = vmul.f32 %v724, %v1644
        %v1646 = vmul.f32 %v725, %v1644
        %v1647 = vmul.f32 %v1645, %v1633
        %v1648 = vmul.f32 %v1646, %v1638
        %1649 = vst [vmem:[#allocation2] sm:$0x1] 0.0
        %1650 = vst [vmem:[#allocation2 + $0x11] sm:$0x1] 0.0
        %1651 = vst [vmem:[#allocation2 + $0x1] sm:$0xff] %v1647
        %1652 = vst [vmem:[#allocation2 + $0x9] sm:$0xff] %v1648
        %v1653 = vld [vmem:[#allocation2] sm:$0xff]
        %v1654 = vld [vmem:[#allocation2 + $0x8] sm:$0xff]
        %v1655 = vld [vmem:[%s13] sm:$0xff]
        %v1656 = vld [vmem:[%s13 + $0x8] sm:$0xff]
        %v1657 = vld [vmem:[%s13 + $0x10] sm:$0xff]
        %v1658 = vld [vmem:[%s13 + $0x18] sm:$0xff]
        %v1659 = vld [vmem:[%s13 + $0x20] sm:$0xff]
        %v1660 = vld [vmem:[%s13 + $0x28] sm:$0xff]
        %v1661 = vld [vmem:[%s13 + $0x30] sm:$0xff]
        %v1662 = vld [vmem:[%s13 + $0x38] sm:$0xff]
        %v1663 = vld [vmem:[%s13 + $0x40] sm:$0xff]
        %v1664 = vld [vmem:[%s13 + $0x48] sm:$0xff]
        %v1665 = vld [vmem:[%s13 + $0x50] sm:$0xff]
        %v1666 = vld [vmem:[%s13 + $0x58] sm:$0xff]
        %v1667 = vld [vmem:[%s13 + $0x60] sm:$0xff]
        %v1668 = vld [vmem:[%s13 + $0x68] sm:$0xff]
        %v1669 = vld [vmem:[%s13 + $0x70] sm:$0xff]
        %v1670 = vld [vmem:[%s13 + $0x78] sm:$0xff]
        %v1671 = vld [vmem:[#allocation2 + $0x1] sm:$0xff]
        %v1672 = vld [vmem:[#allocation2 + $0x9] sm:$0xff]
        %s1673 = scalar_lea.vmem %s13, 128
        %v1674 = vld [vmem:[%s1673] sm:$0xff]
        %v1675 = vld [vmem:[%s1673 + $0x8] sm:$0xff]
        %v1676 = vld [vmem:[%s1673 + $0x10] sm:$0xff]
        %v1677 = vld [vmem:[%s1673 + $0x18] sm:$0xff]
        %v1678 = vld [vmem:[%s1673 + $0x20] sm:$0xff]
        %v1679 = vld [vmem:[%s1673 + $0x28] sm:$0xff]
        %v1680 = vld [vmem:[%s1673 + $0x30] sm:$0xff]
        %v1681 = vld [vmem:[%s1673 + $0x38] sm:$0xff]
        %v1682 = vld [vmem:[%s1673 + $0x40] sm:$0xff]
        %v1683 = vld [vmem:[%s1673 + $0x48] sm:$0xff]
        %v1684 = vld [vmem:[%s1673 + $0x50] sm:$0xff]
        %v1685 = vld [vmem:[%s1673 + $0x58] sm:$0xff]
        %v1686 = vld [vmem:[%s1673 + $0x60] sm:$0xff]
        %v1687 = vld [vmem:[%s1673 + $0x68] sm:$0xff]
        %v1688 = vld [vmem:[%s1673 + $0x70] sm:$0xff]
        %v1689 = vld [vmem:[%s1673 + $0x78] sm:$0xff]
        %1690 = vmatprep.subr.mxu0 0.0
        %1691 = vmatpush1.msra.mxu0 %v1689
        %1692 = vmatprep.subr.mxu0 0.0
        %1693 = vmatpush1.msra.mxu0 %v1688
        %1694 = vmatprep.subr.mxu0 0.0
        %1695 = vmatpush1.msra.mxu0 %v1687
        %1696 = vmatprep.subr.mxu0 0.0
        %1697 = vmatpush1.msra.mxu0 %v1686
        %1698 = vmatprep.subr.mxu0 0.0
        %1699 = vmatpush1.msra.mxu0 %v1685
        %1700 = vmatprep.subr.mxu0 0.0
        %1701 = vmatpush1.msra.mxu0 %v1684
        %1702 = vmatprep.subr.mxu0 0.0
        %1703 = vmatpush1.msra.mxu0 %v1683
        %1704 = vmatprep.subr.mxu0 0.0
        %1705 = vmatpush1.msra.mxu0 %v1682
        %1706 = vmatprep.subr.mxu0 0.0
        %1707 = vmatpush1.msra.mxu0 %v1681
        %1708 = vmatprep.subr.mxu0 0.0
        %1709 = vmatpush1.msra.mxu0 %v1680
        %1710 = vmatprep.subr.mxu0 0.0
        %1711 = vmatpush1.msra.mxu0 %v1679
        %1712 = vmatprep.subr.mxu0 0.0
        %1713 = vmatpush1.msra.mxu0 %v1678
        %1714 = vmatprep.subr.mxu0 0.0
        %1715 = vmatpush1.msra.mxu0 %v1677
        %1716 = vmatprep.subr.mxu0 0.0
        %1717 = vmatpush1.msra.mxu0 %v1676
        %1718 = vmatprep.subr.mxu0 0.0
        %1719 = vmatpush1.msra.mxu0 %v1675
        %1720 = vmatprep.subr.mxu0 0.0
        %1721 = vmatpush1.msra.mxu0 %v1674
        %1722 = vmatprep.subr.mxu0 0.0
        %1723 = vmatpush2.msra.mxu0 0.0
        %1724 = vmatprep.subr.mxu0 0.0
        %1725 = vmatpush2.msra.mxu0 0.0
        %1726 = vmatprep.subr.mxu0 0.0
        %1727 = vmatpush2.msra.mxu0 0.0
        %1728 = vmatprep.subr.mxu0 0.0
        %1729 = vmatpush2.msra.mxu0 0.0
        %1730 = vmatprep.subr.mxu0 0.0
        %1731 = vmatpush2.msra.mxu0 0.0
        %1732 = vmatprep.subr.mxu0 0.0
        %1733 = vmatpush2.msra.mxu0 0.0
        %1734 = vmatprep.subr.mxu0 0.0
        %1735 = vmatpush2.msra.mxu0 0.0
        %1736 = vmatprep.subr.mxu0 0.0
        %1737 = vmatpush2.msra.mxu0 0.0
        %1738 = vmatprep.subr.mxu0 0.0
        %1739 = vmatpush2.msra.mxu0 0.0
        %1740 = vmatprep.subr.mxu0 0.0
        %1741 = vmatpush2.msra.mxu0 0.0
        %1742 = vmatprep.subr.mxu0 0.0
        %1743 = vmatpush2.msra.mxu0 0.0
        %1744 = vmatprep.subr.mxu0 0.0
        %1745 = vmatpush2.msra.mxu0 0.0
        %1746 = vmatprep.subr.mxu0 0.0
        %1747 = vmatpush2.msra.mxu0 0.0
        %1748 = vmatprep.subr.mxu0 0.0
        %1749 = vmatpush2.msra.mxu0 0.0
        %1750 = vmatprep.subr.mxu0 0.0
        %1751 = vmatpush2.msra.mxu0 0.0
        %1752 = vmatprep.subr.mxu0 0.0
        %1753 = vmatpush2.msra.mxu0 0.0
        %1754 = vmatprep.mubr.f32.mxu0 0.0
        %1755 = vmatmul.mubr.f32.gmra.mxu0 %v1671
        %v1756 = vpop.f32.mrf.mxu0
        %v1757 = vadd.f32 0.0, %v1756
        %v1758 = vpop.f32.mrf.mxu0
        %1759 = vmatprep.mubr.f32.mxu0 0.0
        %1760 = vmatmul.mubr.f32.gmra.mxu0 %v1672
        %v1761 = vpop.f32.mrf.mxu0
        %v1762 = vadd.f32 0.0, %v1761
        %v1763 = vpop.f32.mrf.mxu0
        %1764 = vdwg.mxu0
        %1765 = vmatprep.subr.mxu0 0.0
        %1766 = vmatpush1.msra.mxu0 %v1670
        %1767 = vmatprep.subr.mxu0 0.0
        %1768 = vmatpush1.msra.mxu0 %v1669
        %1769 = vmatprep.subr.mxu0 0.0
        %1770 = vmatpush1.msra.mxu0 %v1668
        %1771 = vmatprep.subr.mxu0 0.0
        %1772 = vmatpush1.msra.mxu0 %v1667
        %1773 = vmatprep.subr.mxu0 0.0
        %1774 = vmatpush1.msra.mxu0 %v1666
        %1775 = vmatprep.subr.mxu0 0.0
        %1776 = vmatpush1.msra.mxu0 %v1665
        %1777 = vmatprep.subr.mxu0 0.0
        %1778 = vmatpush1.msra.mxu0 %v1664
        %1779 = vmatprep.subr.mxu0 0.0
        %1780 = vmatpush1.msra.mxu0 %v1663
        %1781 = vmatprep.subr.mxu0 0.0
        %1782 = vmatpush1.msra.mxu0 %v1662
        %1783 = vmatprep.subr.mxu0 0.0
        %1784 = vmatpush1.msra.mxu0 %v1661
        %1785 = vmatprep.subr.mxu0 0.0
        %1786 = vmatpush1.msra.mxu0 %v1660
        %1787 = vmatprep.subr.mxu0 0.0
        %1788 = vmatpush1.msra.mxu0 %v1659
        %1789 = vmatprep.subr.mxu0 0.0
        %1790 = vmatpush1.msra.mxu0 %v1658
        %1791 = vmatprep.subr.mxu0 0.0
        %1792 = vmatpush1.msra.mxu0 %v1657
        %1793 = vmatprep.subr.mxu0 0.0
        %1794 = vmatpush1.msra.mxu0 %v1656
        %1795 = vmatprep.subr.mxu0 0.0
        %1796 = vmatpush1.msra.mxu0 %v1655
        %1797 = vmatprep.subr.mxu0 0.0
        %1798 = vmatpush2.msra.mxu0 0.0
        %1799 = vmatprep.subr.mxu0 0.0
        %1800 = vmatpush2.msra.mxu0 0.0
        %1801 = vmatprep.subr.mxu0 0.0
        %1802 = vmatpush2.msra.mxu0 0.0
        %1803 = vmatprep.subr.mxu0 0.0
        %1804 = vmatpush2.msra.mxu0 0.0
        %1805 = vmatprep.subr.mxu0 0.0
        %1806 = vmatpush2.msra.mxu0 0.0
        %1807 = vmatprep.subr.mxu0 0.0
        %1808 = vmatpush2.msra.mxu0 0.0
        %1809 = vmatprep.subr.mxu0 0.0
        %1810 = vmatpush2.msra.mxu0 0.0
        %1811 = vmatprep.subr.mxu0 0.0
        %1812 = vmatpush2.msra.mxu0 0.0
        %1813 = vmatprep.subr.mxu0 0.0
        %1814 = vmatpush2.msra.mxu0 0.0
        %1815 = vmatprep.subr.mxu0 0.0
        %1816 = vmatpush2.msra.mxu0 0.0
        %1817 = vmatprep.subr.mxu0 0.0
        %1818 = vmatpush2.msra.mxu0 0.0
        %1819 = vmatprep.subr.mxu0 0.0
        %1820 = vmatpush2.msra.mxu0 0.0
        %1821 = vmatprep.subr.mxu0 0.0
        %1822 = vmatpush2.msra.mxu0 0.0
        %1823 = vmatprep.subr.mxu0 0.0
        %1824 = vmatpush2.msra.mxu0 0.0
        %1825 = vmatprep.subr.mxu0 0.0
        %1826 = vmatpush2.msra.mxu0 0.0
        %1827 = vmatprep.subr.mxu0 0.0
        %1828 = vmatpush2.msra.mxu0 0.0
        %1829 = vmatprep.mubr.f32.mxu0 0.0
        %1830 = vmatmul.mubr.f32.gmra.mxu0 %v1653
        %v1831 = vpop.f32.mrf.mxu0
        %v1832 = vadd.f32 %v1757, %v1831
        %v1833 = vpop.f32.mrf.mxu0
        %1834 = vmatprep.mubr.f32.mxu0 0.0
        %1835 = vmatmul.mubr.f32.gmra.mxu0 %v1654
        %v1836 = vpop.f32.mrf.mxu0
        %v1837 = vadd.f32 %v1762, %v1836
        %v1838 = vpop.f32.mrf.mxu0
        %1839 = vdwg.mxu0
        %v1840 = vld [vmem:[#allocation2 + $0x2] sm:$0xff]
        %v1841 = vld [vmem:[#allocation2 + $0xa] sm:$0xff]
        %s1842 = scalar_lea.vmem %s13, 256
        %v1843 = vld [vmem:[%s1842] sm:$0xff]
        %v1844 = vld [vmem:[%s1842 + $0x8] sm:$0xff]
        %v1845 = vld [vmem:[%s1842 + $0x10] sm:$0xff]
        %v1846 = vld [vmem:[%s1842 + $0x18] sm:$0xff]
        %v1847 = vld [vmem:[%s1842 + $0x20] sm:$0xff]
        %v1848 = vld [vmem:[%s1842 + $0x28] sm:$0xff]
        %v1849 = vld [vmem:[%s1842 + $0x30] sm:$0xff]
        %v1850 = vld [vmem:[%s1842 + $0x38] sm:$0xff]
        %v1851 = vld [vmem:[%s1842 + $0x40] sm:$0xff]
        %v1852 = vld [vmem:[%s1842 + $0x48] sm:$0xff]
        %v1853 = vld [vmem:[%s1842 + $0x50] sm:$0xff]
        %v1854 = vld [vmem:[%s1842 + $0x58] sm:$0xff]
        %v1855 = vld [vmem:[%s1842 + $0x60] sm:$0xff]
        %v1856 = vld [vmem:[%s1842 + $0x68] sm:$0xff]
        %v1857 = vld [vmem:[%s1842 + $0x70] sm:$0xff]
        %v1858 = vld [vmem:[%s1842 + $0x78] sm:$0xff]
        %1859 = vmatprep.subr.mxu0 0.0
        %1860 = vmatpush1.msra.mxu0 %v1858
        %1861 = vmatprep.subr.mxu0 0.0
        %1862 = vmatpush1.msra.mxu0 %v1857
        %1863 = vmatprep.subr.mxu0 0.0
        %1864 = vmatpush1.msra.mxu0 %v1856
        %1865 = vmatprep.subr.mxu0 0.0
        %1866 = vmatpush1.msra.mxu0 %v1855
        %1867 = vmatprep.subr.mxu0 0.0
        %1868 = vmatpush1.msra.mxu0 %v1854
        %1869 = vmatprep.subr.mxu0 0.0
        %1870 = vmatpush1.msra.mxu0 %v1853
        %1871 = vmatprep.subr.mxu0 0.0
        %1872 = vmatpush1.msra.mxu0 %v1852
        %1873 = vmatprep.subr.mxu0 0.0
        %1874 = vmatpush1.msra.mxu0 %v1851
        %1875 = vmatprep.subr.mxu0 0.0
        %1876 = vmatpush1.msra.mxu0 %v1850
        %1877 = vmatprep.subr.mxu0 0.0
        %1878 = vmatpush1.msra.mxu0 %v1849
        %1879 = vmatprep.subr.mxu0 0.0
        %1880 = vmatpush1.msra.mxu0 %v1848
        %1881 = vmatprep.subr.mxu0 0.0
        %1882 = vmatpush1.msra.mxu0 %v1847
        %1883 = vmatprep.subr.mxu0 0.0
        %1884 = vmatpush1.msra.mxu0 %v1846
        %1885 = vmatprep.subr.mxu0 0.0
        %1886 = vmatpush1.msra.mxu0 %v1845
        %1887 = vmatprep.subr.mxu0 0.0
        %1888 = vmatpush1.msra.mxu0 %v1844
        %1889 = vmatprep.subr.mxu0 0.0
        %1890 = vmatpush1.msra.mxu0 %v1843
        %1891 = vmatprep.subr.mxu0 0.0
        %1892 = vmatpush2.msra.mxu0 0.0
        %1893 = vmatprep.subr.mxu0 0.0
        %1894 = vmatpush2.msra.mxu0 0.0
        %1895 = vmatprep.subr.mxu0 0.0
        %1896 = vmatpush2.msra.mxu0 0.0
        %1897 = vmatprep.subr.mxu0 0.0
        %1898 = vmatpush2.msra.mxu0 0.0
        %1899 = vmatprep.subr.mxu0 0.0
        %1900 = vmatpush2.msra.mxu0 0.0
        %1901 = vmatprep.subr.mxu0 0.0
        %1902 = vmatpush2.msra.mxu0 0.0
        %1903 = vmatprep.subr.mxu0 0.0
        %1904 = vmatpush2.msra.mxu0 0.0
        %1905 = vmatprep.subr.mxu0 0.0
        %1906 = vmatpush2.msra.mxu0 0.0
        %1907 = vmatprep.subr.mxu0 0.0
        %1908 = vmatpush2.msra.mxu0 0.0
        %1909 = vmatprep.subr.mxu0 0.0
        %1910 = vmatpush2.msra.mxu0 0.0
        %1911 = vmatprep.subr.mxu0 0.0
        %1912 = vmatpush2.msra.mxu0 0.0
        %1913 = vmatprep.subr.mxu0 0.0
        %1914 = vmatpush2.msra.mxu0 0.0
        %1915 = vmatprep.subr.mxu0 0.0
        %1916 = vmatpush2.msra.mxu0 0.0
        %1917 = vmatprep.subr.mxu0 0.0
        %1918 = vmatpush2.msra.mxu0 0.0
        %1919 = vmatprep.subr.mxu0 0.0
        %1920 = vmatpush2.msra.mxu0 0.0
        %1921 = vmatprep.subr.mxu0 0.0
        %1922 = vmatpush2.msra.mxu0 0.0
        %1923 = vmatprep.mubr.f32.mxu0 0.0
        %1924 = vmatmul.mubr.f32.gmra.mxu0 %v1840
        %v1925 = vpop.f32.mrf.mxu0
        %v1926 = vadd.f32 0.0, %v1925
        %v1927 = vpop.f32.mrf.mxu0
        %1928 = vmatprep.mubr.f32.mxu0 0.0
        %1929 = vmatmul.mubr.f32.gmra.mxu0 %v1841
        %v1930 = vpop.f32.mrf.mxu0
        %v1931 = vadd.f32 0.0, %v1930
        %v1932 = vpop.f32.mrf.mxu0
        %1933 = vdwg.mxu0
        %v1934 = vadd.f32 %v1832, %v1926
        %v1935 = vadd.f32 %v1837, %v1931
        %v1936 = vld [vmem:[#allocation11] sm:$0x1]
        %v1938 = vlaneseq
        %v1939 = vshrl.u32 %v1938, 7
        %v1940 = vsub.s32 0, %v1939
        %v1941 = vrot.slane %v1936, %v1940
        %v1943 = vmul.f32 %v1934, %v1941
        %v1944 = vmul.f32 %v1935, %v1941
        %v1945 = vld [vmem:[#allocation12] sm:$0x1]
        %v1947 = vlaneseq
        %v1948 = vshrl.u32 %v1947, 7
        %v1949 = vsub.s32 0, %v1948
        %v1950 = vrot.slane %v1945, %v1949
        %v1952 = vadd.f32 %v1943, %v1950
        %v1953 = vadd.f32 %v1944, %v1950
        %v1954 = vmax.f32 %v1952, 0.0
        %v1955 = vmax.f32 %v1953, 0.0
        %1956 = vst [vmem:[#allocation2 + $0x1] sm:$0xff] %v1954
        %1957 = vst [vmem:[#allocation2 + $0x9] sm:$0xff] %v1955
        %v1958 = vld [vmem:[#allocation2] sm:$0xff]
        %v1959 = vld [vmem:[#allocation2 + $0x8] sm:$0xff]
        %v1960 = vld [vmem:[%s16] sm:$0xff]
        %v1961 = vld [vmem:[%s16 + $0x8] sm:$0xff]
        %v1962 = vld [vmem:[%s16 + $0x10] sm:$0xff]
        %v1963 = vld [vmem:[%s16 + $0x18] sm:$0xff]
        %v1964 = vld [vmem:[%s16 + $0x20] sm:$0xff]
        %v1965 = vld [vmem:[%s16 + $0x28] sm:$0xff]
        %v1966 = vld [vmem:[%s16 + $0x30] sm:$0xff]
        %v1967 = vld [vmem:[%s16 + $0x38] sm:$0xff]
        %v1968 = vld [vmem:[%s16 + $0x40] sm:$0xff]
        %v1969 = vld [vmem:[%s16 + $0x48] sm:$0xff]
        %v1970 = vld [vmem:[%s16 + $0x50] sm:$0xff]
        %v1971 = vld [vmem:[%s16 + $0x58] sm:$0xff]
        %v1972 = vld [vmem:[%s16 + $0x60] sm:$0xff]
        %v1973 = vld [vmem:[%s16 + $0x68] sm:$0xff]
        %v1974 = vld [vmem:[%s16 + $0x70] sm:$0xff]
        %v1975 = vld [vmem:[%s16 + $0x78] sm:$0xff]
        %v1976 = vld [vmem:[#allocation2 + $0x1] sm:$0xff]
        %v1977 = vld [vmem:[#allocation2 + $0x9] sm:$0xff]
        %s1978 = scalar_lea.vmem %s16, 128
        %v1979 = vld [vmem:[%s1978] sm:$0xff]
        %v1980 = vld [vmem:[%s1978 + $0x8] sm:$0xff]
        %v1981 = vld [vmem:[%s1978 + $0x10] sm:$0xff]
        %v1982 = vld [vmem:[%s1978 + $0x18] sm:$0xff]
        %v1983 = vld [vmem:[%s1978 + $0x20] sm:$0xff]
        %v1984 = vld [vmem:[%s1978 + $0x28] sm:$0xff]
        %v1985 = vld [vmem:[%s1978 + $0x30] sm:$0xff]
        %v1986 = vld [vmem:[%s1978 + $0x38] sm:$0xff]
        %v1987 = vld [vmem:[%s1978 + $0x40] sm:$0xff]
        %v1988 = vld [vmem:[%s1978 + $0x48] sm:$0xff]
        %v1989 = vld [vmem:[%s1978 + $0x50] sm:$0xff]
        %v1990 = vld [vmem:[%s1978 + $0x58] sm:$0xff]
        %v1991 = vld [vmem:[%s1978 + $0x60] sm:$0xff]
        %v1992 = vld [vmem:[%s1978 + $0x68] sm:$0xff]
        %v1993 = vld [vmem:[%s1978 + $0x70] sm:$0xff]
        %v1994 = vld [vmem:[%s1978 + $0x78] sm:$0xff]
        %1995 = vmatprep.subr.mxu0 0.0
        %1996 = vmatpush1.msra.mxu0 %v1994
        %1997 = vmatprep.subr.mxu0 0.0
        %1998 = vmatpush1.msra.mxu0 %v1993
        %1999 = vmatprep.subr.mxu0 0.0
        %2000 = vmatpush1.msra.mxu0 %v1992
        %2001 = vmatprep.subr.mxu0 0.0
        %2002 = vmatpush1.msra.mxu0 %v1991
        %2003 = vmatprep.subr.mxu0 0.0
        %2004 = vmatpush1.msra.mxu0 %v1990
        %2005 = vmatprep.subr.mxu0 0.0
        %2006 = vmatpush1.msra.mxu0 %v1989
        %2007 = vmatprep.subr.mxu0 0.0
        %2008 = vmatpush1.msra.mxu0 %v1988
        %2009 = vmatprep.subr.mxu0 0.0
        %2010 = vmatpush1.msra.mxu0 %v1987
        %2011 = vmatprep.subr.mxu0 0.0
        %2012 = vmatpush1.msra.mxu0 %v1986
        %2013 = vmatprep.subr.mxu0 0.0
        %2014 = vmatpush1.msra.mxu0 %v1985
        %2015 = vmatprep.subr.mxu0 0.0
        %2016 = vmatpush1.msra.mxu0 %v1984
        %2017 = vmatprep.subr.mxu0 0.0
        %2018 = vmatpush1.msra.mxu0 %v1983
        %2019 = vmatprep.subr.mxu0 0.0
        %2020 = vmatpush1.msra.mxu0 %v1982
        %2021 = vmatprep.subr.mxu0 0.0
        %2022 = vmatpush1.msra.mxu0 %v1981
        %2023 = vmatprep.subr.mxu0 0.0
        %2024 = vmatpush1.msra.mxu0 %v1980
        %2025 = vmatprep.subr.mxu0 0.0
        %2026 = vmatpush1.msra.mxu0 %v1979
        %2027 = vmatprep.subr.mxu0 0.0
        %2028 = vmatpush2.msra.mxu0 0.0
        %2029 = vmatprep.subr.mxu0 0.0
        %2030 = vmatpush2.msra.mxu0 0.0
        %2031 = vmatprep.subr.mxu0 0.0
        %2032 = vmatpush2.msra.mxu0 0.0
        %2033 = vmatprep.subr.mxu0 0.0
        %2034 = vmatpush2.msra.mxu0 0.0
        %2035 = vmatprep.subr.mxu0 0.0
        %2036 = vmatpush2.msra.mxu0 0.0
        %2037 = vmatprep.subr.mxu0 0.0
        %2038 = vmatpush2.msra.mxu0 0.0
        %2039 = vmatprep.subr.mxu0 0.0
        %2040 = vmatpush2.msra.mxu0 0.0
        %2041 = vmatprep.subr.mxu0 0.0
        %2042 = vmatpush2.msra.mxu0 0.0
        %2043 = vmatprep.subr.mxu0 0.0
        %2044 = vmatpush2.msra.mxu0 0.0
        %2045 = vmatprep.subr.mxu0 0.0
        %2046 = vmatpush2.msra.mxu0 0.0
        %2047 = vmatprep.subr.mxu0 0.0
        %2048 = vmatpush2.msra.mxu0 0.0
        %2049 = vmatprep.subr.mxu0 0.0
        %2050 = vmatpush2.msra.mxu0 0.0
        %2051 = vmatprep.subr.mxu0 0.0
        %2052 = vmatpush2.msra.mxu0 0.0
        %2053 = vmatprep.subr.mxu0 0.0
        %2054 = vmatpush2.msra.mxu0 0.0
        %2055 = vmatprep.subr.mxu0 0.0
        %2056 = vmatpush2.msra.mxu0 0.0
        %2057 = vmatprep.subr.mxu0 0.0
        %2058 = vmatpush2.msra.mxu0 0.0
        %2059 = vmatprep.mubr.f32.mxu0 0.0
        %2060 = vmatmul.mubr.f32.gmra.mxu0 %v1976
        %v2061 = vpop.f32.mrf.mxu0
        %v2062 = vadd.f32 0.0, %v2061
        %v2063 = vpop.f32.mrf.mxu0
        %2064 = vmatprep.mubr.f32.mxu0 0.0
        %2065 = vmatmul.mubr.f32.gmra.mxu0 %v1977
        %v2066 = vpop.f32.mrf.mxu0
        %v2067 = vadd.f32 0.0, %v2066
        %v2068 = vpop.f32.mrf.mxu0
        %2069 = vdwg.mxu0
        %2070 = vmatprep.subr.mxu0 0.0
        %2071 = vmatpush1.msra.mxu0 %v1975
        %2072 = vmatprep.subr.mxu0 0.0
        %2073 = vmatpush1.msra.mxu0 %v1974
        %2074 = vmatprep.subr.mxu0 0.0
        %2075 = vmatpush1.msra.mxu0 %v1973
        %2076 = vmatprep.subr.mxu0 0.0
        %2077 = vmatpush1.msra.mxu0 %v1972
        %2078 = vmatprep.subr.mxu0 0.0
        %2079 = vmatpush1.msra.mxu0 %v1971
        %2080 = vmatprep.subr.mxu0 0.0
        %2081 = vmatpush1.msra.mxu0 %v1970
        %2082 = vmatprep.subr.mxu0 0.0
        %2083 = vmatpush1.msra.mxu0 %v1969
        %2084 = vmatprep.subr.mxu0 0.0
        %2085 = vmatpush1.msra.mxu0 %v1968
        %2086 = vmatprep.subr.mxu0 0.0
        %2087 = vmatpush1.msra.mxu0 %v1967
        %2088 = vmatprep.subr.mxu0 0.0
        %2089 = vmatpush1.msra.mxu0 %v1966
        %2090 = vmatprep.subr.mxu0 0.0
        %2091 = vmatpush1.msra.mxu0 %v1965
        %2092 = vmatprep.subr.mxu0 0.0
        %2093 = vmatpush1.msra.mxu0 %v1964
        %2094 = vmatprep.subr.mxu0 0.0
        %2095 = vmatpush1.msra.mxu0 %v1963
        %2096 = vmatprep.subr.mxu0 0.0
        %2097 = vmatpush1.msra.mxu0 %v1962
        %2098 = vmatprep.subr.mxu0 0.0
        %2099 = vmatpush1.msra.mxu0 %v1961
        %2100 = vmatprep.subr.mxu0 0.0
        %2101 = vmatpush1.msra.mxu0 %v1960
        %2102 = vmatprep.subr.mxu0 0.0
        %2103 = vmatpush2.msra.mxu0 0.0
        %2104 = vmatprep.subr.mxu0 0.0
        %2105 = vmatpush2.msra.mxu0 0.0
        %2106 = vmatprep.subr.mxu0 0.0
        %2107 = vmatpush2.msra.mxu0 0.0
        %2108 = vmatprep.subr.mxu0 0.0
        %2109 = vmatpush2.msra.mxu0 0.0
        %2110 = vmatprep.subr.mxu0 0.0
        %2111 = vmatpush2.msra.mxu0 0.0
        %2112 = vmatprep.subr.mxu0 0.0
        %2113 = vmatpush2.msra.mxu0 0.0
        %2114 = vmatprep.subr.mxu0 0.0
        %2115 = vmatpush2.msra.mxu0 0.0
        %2116 = vmatprep.subr.mxu0 0.0
        %2117 = vmatpush2.msra.mxu0 0.0
        %2118 = vmatprep.subr.mxu0 0.0
        %2119 = vmatpush2.msra.mxu0 0.0
        %2120 = vmatprep.subr.mxu0 0.0
        %2121 = vmatpush2.msra.mxu0 0.0
        %2122 = vmatprep.subr.mxu0 0.0
        %2123 = vmatpush2.msra.mxu0 0.0
        %2124 = vmatprep.subr.mxu0 0.0
        %2125 = vmatpush2.msra.mxu0 0.0
        %2126 = vmatprep.subr.mxu0 0.0
        %2127 = vmatpush2.msra.mxu0 0.0
        %2128 = vmatprep.subr.mxu0 0.0
        %2129 = vmatpush2.msra.mxu0 0.0
        %2130 = vmatprep.subr.mxu0 0.0
        %2131 = vmatpush2.msra.mxu0 0.0
        %2132 = vmatprep.subr.mxu0 0.0
        %2133 = vmatpush2.msra.mxu0 0.0
        %2134 = vmatprep.mubr.f32.mxu0 0.0
        %2135 = vmatmul.mubr.f32.gmra.mxu0 %v1958
        %v2136 = vpop.f32.mrf.mxu0
        %v2137 = vadd.f32 %v2062, %v2136
        %v2138 = vpop.f32.mrf.mxu0
        %2139 = vmatprep.mubr.f32.mxu0 0.0
        %2140 = vmatmul.mubr.f32.gmra.mxu0 %v1959
        %v2141 = vpop.f32.mrf.mxu0
        %v2142 = vadd.f32 %v2067, %v2141
        %v2143 = vpop.f32.mrf.mxu0
        %2144 = vdwg.mxu0
        %v2145 = vld [vmem:[#allocation2 + $0x2] sm:$0xff]
        %v2146 = vld [vmem:[#allocation2 + $0xa] sm:$0xff]
        %s2147 = scalar_lea.vmem %s16, 256
        %v2148 = vld [vmem:[%s2147] sm:$0xff]
        %v2149 = vld [vmem:[%s2147 + $0x8] sm:$0xff]
        %v2150 = vld [vmem:[%s2147 + $0x10] sm:$0xff]
        %v2151 = vld [vmem:[%s2147 + $0x18] sm:$0xff]
        %v2152 = vld [vmem:[%s2147 + $0x20] sm:$0xff]
        %v2153 = vld [vmem:[%s2147 + $0x28] sm:$0xff]
        %v2154 = vld [vmem:[%s2147 + $0x30] sm:$0xff]
        %v2155 = vld [vmem:[%s2147 + $0x38] sm:$0xff]
        %v2156 = vld [vmem:[%s2147 + $0x40] sm:$0xff]
        %v2157 = vld [vmem:[%s2147 + $0x48] sm:$0xff]
        %v2158 = vld [vmem:[%s2147 + $0x50] sm:$0xff]
        %v2159 = vld [vmem:[%s2147 + $0x58] sm:$0xff]
        %v2160 = vld [vmem:[%s2147 + $0x60] sm:$0xff]
        %v2161 = vld [vmem:[%s2147 + $0x68] sm:$0xff]
        %v2162 = vld [vmem:[%s2147 + $0x70] sm:$0xff]
        %v2163 = vld [vmem:[%s2147 + $0x78] sm:$0xff]
        %2164 = vmatprep.subr.mxu0 0.0
        %2165 = vmatpush1.msra.mxu0 %v2163
        %2166 = vmatprep.subr.mxu0 0.0
        %2167 = vmatpush1.msra.mxu0 %v2162
        %2168 = vmatprep.subr.mxu0 0.0
        %2169 = vmatpush1.msra.mxu0 %v2161
        %2170 = vmatprep.subr.mxu0 0.0
        %2171 = vmatpush1.msra.mxu0 %v2160
        %2172 = vmatprep.subr.mxu0 0.0
        %2173 = vmatpush1.msra.mxu0 %v2159
        %2174 = vmatprep.subr.mxu0 0.0
        %2175 = vmatpush1.msra.mxu0 %v2158
        %2176 = vmatprep.subr.mxu0 0.0
        %2177 = vmatpush1.msra.mxu0 %v2157
        %2178 = vmatprep.subr.mxu0 0.0
        %2179 = vmatpush1.msra.mxu0 %v2156
        %2180 = vmatprep.subr.mxu0 0.0
        %2181 = vmatpush1.msra.mxu0 %v2155
        %2182 = vmatprep.subr.mxu0 0.0
        %2183 = vmatpush1.msra.mxu0 %v2154
        %2184 = vmatprep.subr.mxu0 0.0
        %2185 = vmatpush1.msra.mxu0 %v2153
        %2186 = vmatprep.subr.mxu0 0.0
        %2187 = vmatpush1.msra.mxu0 %v2152
        %2188 = vmatprep.subr.mxu0 0.0
        %2189 = vmatpush1.msra.mxu0 %v2151
        %2190 = vmatprep.subr.mxu0 0.0
        %2191 = vmatpush1.msra.mxu0 %v2150
        %2192 = vmatprep.subr.mxu0 0.0
        %2193 = vmatpush1.msra.mxu0 %v2149
        %2194 = vmatprep.subr.mxu0 0.0
        %2195 = vmatpush1.msra.mxu0 %v2148
        %2196 = vmatprep.subr.mxu0 0.0
        %2197 = vmatpush2.msra.mxu0 0.0
        %2198 = vmatprep.subr.mxu0 0.0
        %2199 = vmatpush2.msra.mxu0 0.0
        %2200 = vmatprep.subr.mxu0 0.0
        %2201 = vmatpush2.msra.mxu0 0.0
        %2202 = vmatprep.subr.mxu0 0.0
        %2203 = vmatpush2.msra.mxu0 0.0
        %2204 = vmatprep.subr.mxu0 0.0
        %2205 = vmatpush2.msra.mxu0 0.0
        %2206 = vmatprep.subr.mxu0 0.0
        %2207 = vmatpush2.msra.mxu0 0.0
        %2208 = vmatprep.subr.mxu0 0.0
        %2209 = vmatpush2.msra.mxu0 0.0
        %2210 = vmatprep.subr.mxu0 0.0
        %2211 = vmatpush2.msra.mxu0 0.0
        %2212 = vmatprep.subr.mxu0 0.0
        %2213 = vmatpush2.msra.mxu0 0.0
        %2214 = vmatprep.subr.mxu0 0.0
        %2215 = vmatpush2.msra.mxu0 0.0
        %2216 = vmatprep.subr.mxu0 0.0
        %2217 = vmatpush2.msra.mxu0 0.0
        %2218 = vmatprep.subr.mxu0 0.0
        %2219 = vmatpush2.msra.mxu0 0.0
        %2220 = vmatprep.subr.mxu0 0.0
        %2221 = vmatpush2.msra.mxu0 0.0
        %2222 = vmatprep.subr.mxu0 0.0
        %2223 = vmatpush2.msra.mxu0 0.0
        %2224 = vmatprep.subr.mxu0 0.0
        %2225 = vmatpush2.msra.mxu0 0.0
        %2226 = vmatprep.subr.mxu0 0.0
        %2227 = vmatpush2.msra.mxu0 0.0
        %2228 = vmatprep.mubr.f32.mxu0 0.0
        %2229 = vmatmul.mubr.f32.gmra.mxu0 %v2145
        %v2230 = vpop.f32.mrf.mxu0
        %v2231 = vadd.f32 0.0, %v2230
        %v2232 = vpop.f32.mrf.mxu0
        %2233 = vmatprep.mubr.f32.mxu0 0.0
        %2234 = vmatmul.mubr.f32.gmra.mxu0 %v2146
        %v2235 = vpop.f32.mrf.mxu0
        %v2236 = vadd.f32 0.0, %v2235
        %v2237 = vpop.f32.mrf.mxu0
        %2238 = vdwg.mxu0
        %v2239 = vadd.f32 %v2137, %v2231
        %v2240 = vadd.f32 %v2142, %v2236
        %v2241 = vld [vmem:[#allocation14] sm:$0x1]
        %v2243 = vlaneseq
        %v2244 = vshrl.u32 %v2243, 7
        %v2245 = vsub.s32 0, %v2244
        %v2246 = vrot.slane %v2241, %v2245
        %v2248 = vmul.f32 %v2239, %v2246
        %v2249 = vmul.f32 %v2240, %v2246
        %v2250 = vld [vmem:[#allocation15] sm:$0x1]
        %v2252 = vlaneseq
        %v2253 = vshrl.u32 %v2252, 7
        %v2254 = vsub.s32 0, %v2253
        %v2255 = vrot.slane %v2250, %v2254
        %v2257 = vadd.f32 %v2248, %v2255
        %v2258 = vadd.f32 %v2249, %v2255
        %v2259 = vadd.f32 %v2257, %v1647
        %v2260 = vadd.f32 %v2258, %v1648
        %v2261 = vmax.f32 %v2259, 0.0
        %v2262 = vmax.f32 %v2260, 0.0
        %2263 = vst [vmem:[%s705] sm:$0xff] %v2261
        %2264 = vst [vmem:[%s705 + $0x8] sm:$0xff] %v2262
        %p2265 = scmp.lt.s32.totalorder %s35, 1
        %s2266 = scalar_select %p2265, %s35, 1
        %s2267 = smul.addr %s2266, 2
        %s2268 = smul.addr %s2267, 8
        %s2269 = scalar_lea.vmem %s19, %s2268
        // Predicated region
        $region129: #{custom_basic_block_nhwc.1} parent=95 // pred_check
          %p2270 = pneg %p457
        $region130: #{custom_basic_block_nhwc.1} parent=95 // pred_check_branch
          %2272 = sbr.rel (%p2270) target = $region132
        $region131: #{custom_basic_block_nhwc.1} parent=95 // pred_region
          _
        $region132: #{custom_basic_block_nhwc.1} parent=95 // pred_fallthru
          _
      $region96: #{custom_basic_block_nhwc.1} parent=5 // pred_fallthru
        _
      %p2273 = scmp.le.s32.totalorder 2, %s30
      // Predicated region
      $region133: #{custom_basic_block_nhwc.1} parent=5 // pred_check
        %p2274 = pneg %p2273
      $region134: #{custom_basic_block_nhwc.1} parent=5 // pred_check_branch
        %2276 = sbr.rel (%p2274) target = $region136
      $region135: #{custom_basic_block_nhwc.1} parent=5 // pred_region
        %s2277 = ssub.s32 %s30, 2
        // Predicated region
        $region137: #{custom_basic_block_nhwc.1} parent=135 // pred_check
          %p2278 = pneg %p463
        $region138: #{custom_basic_block_nhwc.1} parent=135 // pred_check_branch
          %2280 = sbr.rel (%p2278) target = $region140
        $region139: #{custom_basic_block_nhwc.1} parent=135 // pred_region
          %p2281 = scmp.lt.s32.totalorder %s36, 1
          %s2282 = scalar_select %p2281, %s36, 1
          %s2283 = smul.addr %s2282, 2
          %s2284 = smul.addr %s2283, 8
          %s2285 = scalar_lea.vmem %s19, %s2284
        $region140: #{custom_basic_block_nhwc.1} parent=135 // pred_fallthru
          _
      $region136: #{custom_basic_block_nhwc.1} parent=5 // pred_fallthru
        _
    $region6: #{custom_basic_block_nhwc.1} parent=1 // loop_footer
      %s34 = sadd.s32 1, %s30
    $region7: #{custom_basic_block_nhwc.1} parent=1 // loop_footer_branch
      %29 = sbr.rel target = $region3
    $region8: #{custom_basic_block_nhwc.1} parent=1 // loop_exit
      _
    %2286 = vsyncpa [#allocation5], 1
    %s2287 = scalar_lea.sflag [#allocation5], 1
    %2288 = vsyncpa %s2287, 1
    %2289 = vsyncpa [#allocation7], 1
    %2290 = vsyncpa [#allocation10], 1
    %2291 = vsyncpa [#allocation13], 1
    %2292 = vsyncpa [#allocation16], 1

</llo_original>
